<compile_context>
chip_gen: v5e
topology: v5e:2x2
jax: 0.10.0
libtpu: 0.0.40
codegen_flags: <defaults>
</compile_context>

<pallas_src>
import functools

import numpy as np

import jax
import jax.numpy as jnp
from jax.experimental import pallas as pl
from jax.experimental.pallas import tpu as pltpu

LANE = 128


def _round_up(x, m):
    return (x + m - 1) // m * m


# -----------------------------------------------------------------------------
# Fused kernel: embedding gather (one-hot MXU matmul) + conv (single K=max_fs*E
# matmul for all filter sizes) + bias + ReLU + iota-masked max-pool +
# (BN-folded) Linear, for one batch tile.
#   ids_ref  : (bt, l_pad)        int32
#   table_ref: (v_pad, E)         bf16   embedding table (VMEM resident)
#   wcat_ref : (max_fs*E, C_pad)  bf16   all conv taps packed, K = max_fs*E
#   cb_ref   : (1, C_pad)         f32    conv biases
#   fcw_ref  : (C_pad, N_pad)     bf16   FC weights with BN(eval) folded in
#   fcb_ref  : (1, N_pad)         f32    FC bias with BN(eval) folded in
#   o_ref    : (bt, N_pad)        f32
# -----------------------------------------------------------------------------
def textcnn_kernel(ids_ref, table_ref, wcat_ref, cb_ref, fcw_ref, fcb_ref,
                   o_ref, *, t_pad, max_fs, filter_num, valid_lens):
    bt, l_pad = ids_ref.shape
    v_pad, e = table_ref.shape
    k_cat, c_pad = wcat_ref.shape

    # ---- Embedding lookup as a one-hot matmul on the MXU (exact gather). ----
    # TODO(synk): for large vocabularies the table will not fit VMEM; keep the
    # gather in XLA (wrapper side) in that case instead of the one-hot trick.
    ids = ids_ref[...][:, :, None]                               # (bt, l_pad, 1)
    v_iota = jax.lax.broadcasted_iota(jnp.int32, (bt, l_pad, v_pad), 2)
    onehot = (ids == v_iota).astype(jnp.bfloat16).reshape(bt * l_pad, v_pad)
    emb = jnp.dot(onehot, table_ref[...],
                  preferred_element_type=jnp.float32)            # (bt*l_pad, E)
    emb = emb.astype(jnp.bfloat16).reshape(bt, l_pad, e)

    # ---- im2col over taps -> single K = max_fs*E conv matmul (all filters). --
    x_cat = jnp.concatenate(
        [emb[:, j:j + t_pad, :] for j in range(max_fs)],         # static slices
        axis=2).reshape(bt * t_pad, k_cat)                       # (bt*t_pad, K)
    acc = jnp.dot(x_cat, wcat_ref[...],
                  preferred_element_type=jnp.float32)            # (bt*t_pad, C)

    # ---- bias + ReLU, then mask invalid time steps per filter group. --------
    # NOTE: ReLU runs BEFORE the mask, so the injected zeros can never win the
    # max (all valid values are >= 0).  Keep this ordering.
    z = jnp.maximum(acc + cb_ref[...], 0.0).reshape(bt, t_pad, c_pad)
    t_iota = jax.lax.broadcasted_iota(jnp.int32, (t_pad, c_pad), 0)
    c_iota = jax.lax.broadcasted_iota(jnp.int32, (t_pad, c_pad), 1)
    limit = jnp.zeros((t_pad, c_pad), jnp.int32)    # padded cols stay masked
    for idx, n_valid in enumerate(valid_lens):      # static, unrolled
        grp = (c_iota >= idx * filter_num) & (c_iota < (idx + 1) * filter_num)
        limit = jnp.where(grp, n_valid, limit)
    z = jnp.where((t_iota < limit)[None, :, :], z, 0.0)
    pooled = jnp.max(z, axis=1)                                  # (bt, C_pad)

    # ---- BatchNorm(eval) is folded into fcw/fcb; dropout identity in eval. --
    o_ref[...] = jnp.dot(pooled.astype(jnp.bfloat16), fcw_ref[...],
                         preferred_element_type=jnp.float32) + fcb_ref[...]


# -----------------------------------------------------------------------------
# Wrapper: pad the int32 ids, one fused pallas_call tiled over batch.
# -----------------------------------------------------------------------------
@functools.partial(
    jax.jit,
    static_argnames=("filter_sizes", "filter_num", "num_classes", "batch_tile"))
def textcnn_forward(token_ids, kparams, *, filter_sizes, filter_num,
                    num_classes, batch_tile=128):
    B, L = token_ids.shape
    max_fs, min_fs = max(filter_sizes), min(filter_sizes)
    assert L >= max_fs, "sequence shorter than largest filter"

    t_max = L - min_fs + 1
    t_pad = _round_up(t_max, 8)                  # sublane-aligned time axis
    l_pad = _round_up(t_pad + max_fs - 1, 8)     # >= L; covers every tap window
    v_pad, emb_dim = kparams["table"].shape
    k_cat, c_pad = kparams["w_cat"].shape
    n_pad = kparams["fc_w"].shape[-1]

    # Batch tile: as large as possible while keeping >= 4 grid steps (so each
    # v7x TensorCore gets >= 2 pipelined steps); always a multiple of 8.
    bt = min(batch_tile, _round_up(B, 8) // 4)
    bt = max(8, (bt // 8) * 8)
    b_pad = _round_up(B, bt)

    # Pad only the int32 ids (not a gathered f32/bf16 activation) — padded
    # positions hit zero weight columns or masked time steps, never the output.
    ids = jnp.pad(token_ids, ((0, b_pad - B), (0, l_pad - L)))

    valid_lens = tuple(L - fs + 1 for fs in filter_sizes)

    out = pl.pallas_call(
        functools.partial(textcnn_kernel, t_pad=t_pad, max_fs=max_fs,
                          filter_num=filter_num, valid_lens=valid_lens),
        out_shape=jax.ShapeDtypeStruct((b_pad, n_pad), jnp.float32),
        grid=(b_pad // bt,),
        in_specs=[
            pl.BlockSpec((bt, l_pad), lambda i: (i, 0)),
            # Constant index maps: DMA'd once, VMEM resident across batch steps.
            # (pipeline_mode=pl.Buffered(1) could drop their 2nd buffer, but it
            # only saves a few KiB here.)
            pl.BlockSpec((v_pad, emb_dim), lambda i: (0, 0)),
            pl.BlockSpec((k_cat, c_pad), lambda i: (0, 0)),
            pl.BlockSpec((1, c_pad), lambda i: (0, 0)),
            pl.BlockSpec((c_pad, n_pad), lambda i: (0, 0)),
            pl.BlockSpec((1, n_pad), lambda i: (0, 0)),
        ],
        out_specs=pl.BlockSpec((bt, n_pad), lambda i: (i, 0)),
        compiler_params=pltpu.CompilerParams(
            dimension_semantics=("parallel",),
            vmem_limit_bytes=32 * 1024 * 1024),
    )(ids, kparams["table"], kparams["w_cat"], kparams["conv_b"],
      kparams["fc_w"], kparams["fc_b"])

    return out[:B, :num_classes]


# -----------------------------------------------------------------------------
# Parameter init (PyTorch-like layouts, f32) + packing into kernel layouts.
# -----------------------------------------------------------------------------
def init_raw_params(key, vocab_size, embed_dim, filter_num, filter_sizes,
                    num_classes):
    keys = jax.random.split(key, 4 + 2 * len(filter_sizes))
    C = filter_num * len(filter_sizes)
    raw = {
        "embedding": jax.random.normal(keys[0], (vocab_size, embed_dim),
                                       jnp.float32) * 0.1,
        "conv_w": [],                      # per fs: (F, fs, E)  (== (F,1,fs,E))
        "conv_b": [],                      # per fs: (F,)
        "bn_gamma": jnp.ones((C,), jnp.float32),
        "bn_beta": jnp.zeros((C,), jnp.float32),
        "bn_mean": jax.random.normal(keys[1], (C,), jnp.float32) * 0.01,
        "bn_var": jnp.ones((C,), jnp.float32)
                  + jax.random.uniform(keys[2], (C,), jnp.float32) * 0.1,
        "fc_w": jax.random.normal(keys[3], (C, num_classes),
                                  jnp.float32) * 0.05,
        "fc_b": jnp.zeros((num_classes,), jnp.float32),
    }
    for idx, fs in enumerate(filter_sizes):
        kw, kb = keys[4 + 2 * idx], keys[5 + 2 * idx]
        raw["conv_w"].append(
            jax.random.normal(kw, (filter_num, fs, embed_dim),
                              jnp.float32) * 0.05)
        raw["conv_b"].append(
            jax.random.normal(kb, (filter_num,), jnp.float32) * 0.01)
    return raw


def pack_params(raw, filter_sizes, filter_num, num_classes, embed_dim,
                eps=1e-5):
    """Pack PyTorch-style params into lane-padded, bf16 kernel layouts.

    Invariants relied on by the kernel (keep them if this code changes):
      * taps j >= fs for a filter group, all padded channel columns, padded
        vocab rows, and padded FC rows/cols stay zero;
      * BatchNorm(eval) is folded into fc_w / fc_b here (dropout is identity).
    """
    C = filter_num * len(filter_sizes)
    c_pad = _round_up(C, LANE)
    n_pad = _round_up(num_classes, LANE)
    max_fs = max(filter_sizes)
    vocab_size = raw["embedding"].shape[0]
    v_pad = _round_up(vocab_size, 8)

    table = np.zeros((v_pad, embed_dim), np.float32)
    table[:vocab_size] = np.asarray(raw["embedding"])

    # All conv taps in one (max_fs*E, C_pad) slab -> a single K=max_fs*E matmul.
    w_cat = np.zeros((max_fs * embed_dim, c_pad), np.float32)
    conv_b = np.zeros((1, c_pad), np.float32)
    for idx, fs in enumerate(filter_sizes):
        w = np.asarray(raw["conv_w"][idx])                     # (F, fs, E)
        lo, hi = idx * filter_num, (idx + 1) * filter_num
        for j in range(fs):
            w_cat[j * embed_dim:(j + 1) * embed_dim, lo:hi] = w[:, j, :].T
        conv_b[0, lo:hi] = np.asarray(raw["conv_b"][idx])

    # Fold BatchNorm1d (eval, running stats) into the FC layer:
    #   y = (x - mean) * gamma/sqrt(var+eps) + beta ;  logits = y @ W + b
    #     = x @ (diag(scale) @ W) + ((beta - mean*scale) @ W + b)
    scale = np.asarray(raw["bn_gamma"]) / np.sqrt(np.asarray(raw["bn_var"]) + eps)
    shift = np.asarray(raw["bn_beta"]) - np.asarray(raw["bn_mean"]) * scale
    fc_w_folded = np.asarray(raw["fc_w"]) * scale[:, None]     # (C, num_classes)
    fc_b_folded = np.asarray(raw["fc_b"]) + shift @ np.asarray(raw["fc_w"])

    fc_w = np.zeros((c_pad, n_pad), np.float32)
    fc_w[:C, :num_classes] = fc_w_folded
    fc_b = np.zeros((1, n_pad), np.float32)
    fc_b[0, :num_classes] = fc_b_folded

    return {
        "table": jnp.asarray(table, jnp.bfloat16),
        "w_cat": jnp.asarray(w_cat, jnp.bfloat16),
        "conv_b": jnp.asarray(conv_b),
        "fc_w": jnp.asarray(fc_w, jnp.bfloat16),
        "fc_b": jnp.asarray(fc_b),
    }


# -----------------------------------------------------------------------------
# Pure-JAX f32 reference (mirrors the PyTorch module in eval mode).
# -----------------------------------------------------------------------------
def textcnn_reference(token_ids, raw, filter_sizes, eps=1e-5):
    emb = raw["embedding"][token_ids]                          # (B, L, E) f32
    _, L, _ = emb.shape
    pooled = []
    for idx, fs in enumerate(filter_sizes):
        T = L - fs + 1
        w = raw["conv_w"][idx]                                 # (F, fs, E)
        b = raw["conv_b"][idx]                                 # (F,)
        patches = jnp.stack([emb[:, j:j + T, :] for j in range(fs)], axis=2)
        s = jnp.einsum("btje,fje->btf", patches, w) + b[None, None, :]
        pooled.append(jnp.max(jnp.maximum(s, 0.0), axis=1))
    cat = jnp.concatenate(pooled, axis=1)
    xn = ((cat - raw["bn_mean"]) * jax.lax.rsqrt(raw["bn_var"] + eps)
          * raw["bn_gamma"] + raw["bn_beta"])
    return xn @ raw["fc_w"] + raw["fc_b"]


if __name__ == "__main__":
    vocab_size = 50
    embed_dim = 32
    filter_num = 16
    filter_sizes = (2, 3, 4)
    num_classes = 4
    batch = 64           # small, but exercises a 4-step "parallel" batch grid
    seq_len = 8

    key = jax.random.PRNGKey(0)
    k_params, k_tokens = jax.random.split(key)
    raw = init_raw_params(k_params, vocab_size, embed_dim, filter_num,
                          filter_sizes, num_classes)
    kparams = pack_params(raw, filter_sizes, filter_num, num_classes,
                          embed_dim, eps=1e-5)
    token_ids = jax.random.randint(k_tokens, (batch, seq_len), 0, vocab_size,
                                   dtype=jnp.int32)

    logits = textcnn_forward(token_ids, kparams, filter_sizes=filter_sizes,
                             filter_num=filter_num, num_classes=num_classes)
    logits = jax.block_until_ready(logits)
    assert logits.shape == (batch, num_classes)
    assert logits.dtype == jnp.float32

    ref = textcnn_reference(token_ids, raw, filter_sizes)
    max_err = float(jnp.max(jnp.abs(logits - ref)))
    assert jnp.allclose(logits, ref, atol=5e-3, rtol=5e-2), max_err

    print("KERNEL_OK")
</pallas_src>

<mosaic_0001>
module attributes {stable_mosaic.version = 11 : i64} {
  func.func @textcnn_kernel(%arg0: i32, %arg1: memref<16x16xi32, #tpu.memory_space<vmem>>, %arg2: memref<56x32xbf16, #tpu.memory_space<vmem>>, %arg3: memref<128x128xbf16, #tpu.memory_space<vmem>>, %arg4: memref<1x128xf32, #tpu.memory_space<vmem>>, %arg5: memref<128x128xbf16, #tpu.memory_space<vmem>>, %arg6: memref<1x128xf32, #tpu.memory_space<vmem>>, %arg7: memref<16x128xf32, #tpu.memory_space<vmem>>) attributes {dimension_semantics = [#tpu.dimension_semantics<parallel>], iteration_bounds = array<i64: 4>, scalar_prefetch = 0 : i64, scratch_operands = 0 : i64, tpu.core_type = #tpu.core_type<tc>, window_params = [{transform_indices = @transform_0, window_bounds = array<i64: 16, 16>}, {pipeline_mode = #tpu.pipeline_mode<synchronous>, transform_indices = @transform_1, window_bounds = array<i64: 56, 32>}, {pipeline_mode = #tpu.pipeline_mode<synchronous>, transform_indices = @transform_2, window_bounds = array<i64: 128, 128>}, {pipeline_mode = #tpu.pipeline_mode<synchronous>, transform_indices = @transform_3, window_bounds = array<i64: 1, 128>}, {pipeline_mode = #tpu.pipeline_mode<synchronous>, transform_indices = @transform_4, window_bounds = array<i64: 128, 128>}, {pipeline_mode = #tpu.pipeline_mode<synchronous>, transform_indices = @transform_5, window_bounds = array<i64: 1, 128>}, {transform_indices = @transform_6, window_bounds = array<i64: 16, 128>}]} {
    %c0 = arith.constant 0 : index
    %c0_0 = arith.constant 0 : index
    %0 = vector.load %arg1[%c0, %c0_0] : memref<16x16xi32, #tpu.memory_space<vmem>>, vector<16x16xi32>
    %1 = vector.shape_cast %0 : vector<16x16xi32> to vector<16x16x1xi32>
    %2 = tpu.iota {dimensions = array<i32: 2>} : vector<16x16x56xi32>
    %3 = vector.broadcast %1 : vector<16x16x1xi32> to vector<16x16x56xi32>
    %4 = arith.cmpi eq, %3, %2 : vector<16x16x56xi32>
    %5 = arith.extui %4 : vector<16x16x56xi1> to vector<16x16x56xi32>
    %6 = arith.sitofp %5 : vector<16x16x56xi32> to vector<16x16x56xf32>
    %7 = arith.truncf %6 : vector<16x16x56xf32> to vector<16x16x56xbf16>
    %8 = vector.shape_cast %7 : vector<16x16x56xbf16> to vector<256x56xbf16>
    %c0_1 = arith.constant 0 : index
    %c0_2 = arith.constant 0 : index
    %9 = vector.load %arg2[%c0_1, %c0_2] : memref<56x32xbf16, #tpu.memory_space<vmem>>, vector<56x32xbf16>
    %cst = arith.constant dense<0.000000e+00> : vector<256x32xf32>
    %10 = tpu.matmul %8, %9, %cst {dimension_numbers = #tpu.dot_dimension_numbers<[1], [0], [0], [1], [0, 0, 1, 1], [], []>} : vector<256x56xbf16>, vector<56x32xbf16>, vector<256x32xf32> -> vector<256x32xf32>
    %11 = arith.truncf %10 : vector<256x32xf32> to vector<256x32xbf16>
    %12 = vector.shape_cast %11 : vector<256x32xbf16> to vector<16x16x32xbf16>
    %13 = vector.extract_strided_slice %12 {offsets = [0, 0, 0], sizes = [16, 8, 32], strides = [1, 1, 1]} : vector<16x16x32xbf16> to vector<16x8x32xbf16>
    %14 = vector.extract_strided_slice %12 {offsets = [0, 1, 0], sizes = [16, 8, 32], strides = [1, 1, 1]} : vector<16x16x32xbf16> to vector<16x8x32xbf16>
    %15 = vector.extract_strided_slice %12 {offsets = [0, 2, 0], sizes = [16, 8, 32], strides = [1, 1, 1]} : vector<16x16x32xbf16> to vector<16x8x32xbf16>
    %16 = vector.extract_strided_slice %12 {offsets = [0, 3, 0], sizes = [16, 8, 32], strides = [1, 1, 1]} : vector<16x16x32xbf16> to vector<16x8x32xbf16>
    %17 = tpu.concatenate %13, %14, %15, %16 in 2 : vector<16x8x32xbf16>, vector<16x8x32xbf16>, vector<16x8x32xbf16>, vector<16x8x32xbf16> -> vector<16x8x128xbf16>
    %18 = vector.shape_cast %17 : vector<16x8x128xbf16> to vector<128x128xbf16>
    %c0_3 = arith.constant 0 : index
    %c0_4 = arith.constant 0 : index
    %19 = vector.load %arg3[%c0_3, %c0_4] : memref<128x128xbf16, #tpu.memory_space<vmem>>, vector<128x128xbf16>
    %cst_5 = arith.constant dense<0.000000e+00> : vector<128x128xf32>
    %20 = tpu.matmul %18, %19, %cst_5 {dimension_numbers = #tpu.dot_dimension_numbers<[1], [0], [0], [1], [0, 0, 1, 1], [], []>} : vector<128x128xbf16>, vector<128x128xbf16>, vector<128x128xf32> -> vector<128x128xf32>
    %c0_6 = arith.constant 0 : index
    %c0_7 = arith.constant 0 : index
    %21 = vector.load %arg4[%c0_6, %c0_7] : memref<1x128xf32, #tpu.memory_space<vmem>>, vector<1x128xf32>
    %22 = vector.broadcast %21 : vector<1x128xf32> to vector<128x128xf32>
    %23 = arith.addf %20, %22 : vector<128x128xf32>
    %cst_8 = arith.constant 0.000000e+00 : f32
    %24 = vector.broadcast %cst_8 : f32 to vector<128x128xf32>
    %25 = arith.maximumf %23, %24 : vector<128x128xf32>
    %26 = vector.shape_cast %25 : vector<128x128xf32> to vector<16x8x128xf32>
    %27 = tpu.iota {dimensions = array<i32: 0>} : vector<8x128xi32>
    %28 = tpu.iota {dimensions = array<i32: 1>} : vector<8x128xi32>
    %c0_i32 = arith.constant 0 : i32
    %29 = vector.broadcast %c0_i32 : i32 to vector<8x128xi32>
    %c0_i32_9 = arith.constant 0 : i32
    %30 = vector.broadcast %c0_i32_9 : i32 to vector<8x128xi32>
    %31 = arith.cmpi sge, %28, %30 : vector<8x128xi32>
    %c16_i32 = arith.constant 16 : i32
    %32 = vector.broadcast %c16_i32 : i32 to vector<8x128xi32>
    %33 = arith.cmpi slt, %28, %32 : vector<8x128xi32>
    %34 = arith.andi %31, %33 : vector<8x128xi1>
    %c7_i32 = arith.constant 7 : i32
    %35 = vector.broadcast %c7_i32 : i32 to vector<8x128xi32>
    %36 = arith.select %34, %35, %29 : vector<8x128xi1>, vector<8x128xi32>
    %c16_i32_10 = arith.constant 16 : i32
    %37 = vector.broadcast %c16_i32_10 : i32 to vector<8x128xi32>
    %38 = arith.cmpi sge, %28, %37 : vector<8x128xi32>
    %c32_i32 = arith.constant 32 : i32
    %39 = vector.broadcast %c32_i32 : i32 to vector<8x128xi32>
    %40 = arith.cmpi slt, %28, %39 : vector<8x128xi32>
    %41 = arith.andi %38, %40 : vector<8x128xi1>
    %c6_i32 = arith.constant 6 : i32
    %42 = vector.broadcast %c6_i32 : i32 to vector<8x128xi32>
    %43 = arith.select %41, %42, %36 : vector<8x128xi1>, vector<8x128xi32>
    %c32_i32_11 = arith.constant 32 : i32
    %44 = vector.broadcast %c32_i32_11 : i32 to vector<8x128xi32>
    %45 = arith.cmpi sge, %28, %44 : vector<8x128xi32>
    %c48_i32 = arith.constant 48 : i32
    %46 = vector.broadcast %c48_i32 : i32 to vector<8x128xi32>
    %47 = arith.cmpi slt, %28, %46 : vector<8x128xi32>
    %48 = arith.andi %45, %47 : vector<8x128xi1>
    %c5_i32 = arith.constant 5 : i32
    %49 = vector.broadcast %c5_i32 : i32 to vector<8x128xi32>
    %50 = arith.select %48, %49, %43 : vector<8x128xi1>, vector<8x128xi32>
    %51 = arith.cmpi slt, %27, %50 : vector<8x128xi32>
    %52 = vector.shape_cast %51 : vector<8x128xi1> to vector<1x8x128xi1>
    %cst_12 = arith.constant 0.000000e+00 : f32
    %53 = vector.shape_cast %52 : vector<1x8x128xi1> to vector<1x8x128xi1>
    %54 = vector.broadcast %53 : vector<1x8x128xi1> to vector<16x8x128xi1>
    %55 = vector.broadcast %cst_12 : f32 to vector<16x8x128xf32>
    %56 = arith.select %54, %26, %55 : vector<16x8x128xi1>, vector<16x8x128xf32>
    %cst_13 = arith.constant dense<0xFF800000> : vector<16x128xf32>
    %57 = vector.multi_reduction <maximumf>, %56, %cst_13 [1] : vector<16x8x128xf32> to vector<16x128xf32>
    %58 = arith.truncf %57 : vector<16x128xf32> to vector<16x128xbf16>
    %c0_14 = arith.constant 0 : index
    %c0_15 = arith.constant 0 : index
    %59 = vector.load %arg5[%c0_14, %c0_15] : memref<128x128xbf16, #tpu.memory_space<vmem>>, vector<128x128xbf16>
    %cst_16 = arith.constant dense<0.000000e+00> : vector<16x128xf32>
    %60 = tpu.matmul %58, %59, %cst_16 {dimension_numbers = #tpu.dot_dimension_numbers<[1], [0], [0], [1], [0, 0, 1, 1], [], []>} : vector<16x128xbf16>, vector<128x128xbf16>, vector<16x128xf32> -> vector<16x128xf32>
    %c0_17 = arith.constant 0 : index
    %c0_18 = arith.constant 0 : index
    %61 = vector.load %arg6[%c0_17, %c0_18] : memref<1x128xf32, #tpu.memory_space<vmem>>, vector<1x128xf32>
    %62 = vector.broadcast %61 : vector<1x128xf32> to vector<16x128xf32>
    %63 = arith.addf %60, %62 : vector<16x128xf32>
    %c0_19 = arith.constant 0 : index
    %c0_20 = arith.constant 0 : index
    %64 = vector.load %arg7[%c0_19, %c0_20] : memref<16x128xf32, #tpu.memory_space<vmem>>, vector<16x128xf32>
    tpu.vector_store %arg7[%c0_19, %c0_20], %63 {strides = array<i32>} : memref<16x128xf32, #tpu.memory_space<vmem>>, vector<16x128xf32>,
    return
  }
  func.func @transform_0(%arg0: i32) -> (i32, i32) {
    %c0_i32 = arith.constant 0 : i32
    %c0_i32_0 = arith.constant 0 : i32
    return %arg0, %c0_i32 : i32, i32
  }
  func.func @transform_1(%arg0: i32) -> (i32, i32) {
    %c0_i32 = arith.constant 0 : i32
    %c0_i32_0 = arith.constant 0 : i32
    %c0_i32_1 = arith.constant 0 : i32
    return %c0_i32, %c0_i32_0 : i32, i32
  }
  func.func @transform_2(%arg0: i32) -> (i32, i32) {
    %c0_i32 = arith.constant 0 : i32
    %c0_i32_0 = arith.constant 0 : i32
    %c0_i32_1 = arith.constant 0 : i32
    return %c0_i32, %c0_i32_0 : i32, i32
  }
  func.func @transform_3(%arg0: i32) -> (i32, i32) {
    %c0_i32 = arith.constant 0 : i32
    %c0_i32_0 = arith.constant 0 : i32
    %c0_i32_1 = arith.constant 0 : i32
    return %c0_i32, %c0_i32_0 : i32, i32
  }
  func.func @transform_4(%arg0: i32) -> (i32, i32) {
    %c0_i32 = arith.constant 0 : i32
    %c0_i32_0 = arith.constant 0 : i32
    %c0_i32_1 = arith.constant 0 : i32
    return %c0_i32, %c0_i32_0 : i32, i32
  }
  func.func @transform_5(%arg0: i32) -> (i32, i32) {
    %c0_i32 = arith.constant 0 : i32
    %c0_i32_0 = arith.constant 0 : i32
    %c0_i32_1 = arith.constant 0 : i32
    return %c0_i32, %c0_i32_0 : i32, i32
  }
  func.func @transform_6(%arg0: i32) -> (i32, i32) {
    %c0_i32 = arith.constant 0 : i32
    %c0_i32_0 = arith.constant 0 : i32
    return %arg0, %c0_i32 : i32, i32
  }
}

</mosaic_0001>

<llo_original>
// kernel: textcnn_forward.1
$region0: #{textcnn_forward.1}
  #allocation0 [shape = 'u32[]', space=smem, size = 0x4, offset = 0x4, fixed_abs, tag = 'smem constant byte address 0x4 - core index']
  #allocation1 [shape = 'u32[72,128]{1,0:T(1,128)}', space=vmem, size = 0x9000, scoped, tag = 'internal scratch']
  %s0 = inlined_call_operand.vmem [shape: s32[64,16], index: 0, kind: input, shape index: {}]
  %s1 = inlined_call_operand.vmem [shape: bf16[56,32], index: 1, kind: input, shape index: {}]
  %s2 = inlined_call_operand.vmem [shape: bf16[128,128], index: 2, kind: input, shape index: {}]
  %s3 = inlined_call_operand.vmem [shape: f32[1,128], index: 3, kind: input, shape index: {}]
  %s4 = inlined_call_operand.vmem [shape: bf16[128,128], index: 4, kind: input, shape index: {}]
  %s5 = inlined_call_operand.vmem [shape: f32[1,128], index: 5, kind: input, shape index: {}]
  %s6 = inlined_call_operand.vmem [shape: f32[64,128], index: 6, kind: output, shape index: {}]
  %s7 = sld [smem:[#allocation0]]
  $region57: #{textcnn_forward.1} parent=0
    _
  %s9 = ssub.s32 1, %s7
  %s10 = scalar_select 0, %s9, %s7
  loop: start=0, step=1, limit=6
  $region2: #{textcnn_forward.1} parent=0 // loop_pre_header
    _
  $region3: #{textcnn_forward.1} parent=0 // loop_header
    %s12 = sphi 0, %s16
    %p13 = scmp.ge.s32.totalorder %s12, 6
    %s22 = sphi 0, %s24
    %s25 = sphi 0, %s22
    %s26 = sphi 0, %s25
    %s42 = sphi 0, %s26
    %s46 = sphi 0, %s46
    %s48 = sphi 0, %s46
    %s49 = sphi 0, %s48
    %s63 = sphi 0, %s49
    %s67 = sphi 0, %s67
    %s69 = sphi 0, %s67
    %s70 = sphi 0, %s69
    %s84 = sphi 0, %s70
    %s88 = sphi 0, %s88
    %s90 = sphi 0, %s88
    %s91 = sphi 0, %s90
    %s105 = sphi 0, %s91
    %s109 = sphi 0, %s109
    %s111 = sphi 0, %s109
    %s112 = sphi 0, %s111
    %s126 = sphi 0, %s112
    %s130 = sphi 0, %s130
    %s132 = sphi 0, %s130
    %s133 = sphi 0, %s132
    %s147 = sphi 0, %s133
    %s153 = sphi 0, %s155
    %s156 = sphi 0, %s153
    %s157 = sphi 0, %s156
    %s173 = sphi 0, %s157
  $region4: #{textcnn_forward.1} parent=0 // loop_header_branch
    %15 = sbr.rel (%p13) target = $region8
  $region5: #{textcnn_forward.1} parent=0 // loop_body
    %s17 = ssub.s32 %s12, 1
    %s18 = ssub.s32 %s12, 2
    %s19 = sadd.s32 %s12, 1
    %s20 = ssub.s32 %s12, %s19
    %p21 = scmp.eq.s32.totalorder %s20, 0
    %s23 = sadd.s32 %s22, 1
    %s24 = scalar_select %p21, %s22, %s23
    %p27 = pneg %p21
    %p28 = scmp.eq.s32.totalorder %s12, 3
    %p29 = por %p27, %p28
    %p30 = scmp.ne.s32.totalorder %s22, %s25
    %p31 = scmp.eq.s32.totalorder %s12, 0
    %p32 = por %p30, %p31
    %p33 = scmp.ne.s32.totalorder %s22, %s25
    %p34 = scmp.eq.s32.totalorder %s17, 3
    %p35 = por %p33, %p34
    %p36 = scmp.ne.s32.totalorder %s25, %s26
    %p37 = scmp.eq.s32.totalorder %s17, 0
    %p38 = por %p36, %p37
    %p39 = scmp.ne.s32.totalorder %s25, %s26
    %p40 = scmp.eq.s32.totalorder %s18, 3
    %p41 = por %p39, %p40
    %p43 = scmp.ne.s32.totalorder %s26, %s42
    %p44 = scmp.eq.s32.totalorder %s18, 0
    %p45 = por %p43, %p44
    %s47 = sadd.s32 %s46, 1
    %p50 = scmp.eq.s32.totalorder %s12, 3
    %p51 = scmp.ne.s32.totalorder %s46, %s48
    %p52 = scmp.eq.s32.totalorder %s12, 0
    %p53 = por %p51, %p52
    %p54 = scmp.ne.s32.totalorder %s46, %s48
    %p55 = scmp.eq.s32.totalorder %s17, 3
    %p56 = por %p54, %p55
    %p57 = scmp.ne.s32.totalorder %s48, %s49
    %p58 = scmp.eq.s32.totalorder %s17, 0
    %p59 = por %p57, %p58
    %p60 = scmp.ne.s32.totalorder %s48, %s49
    %p61 = scmp.eq.s32.totalorder %s18, 3
    %p62 = por %p60, %p61
    %p64 = scmp.ne.s32.totalorder %s49, %s63
    %p65 = scmp.eq.s32.totalorder %s18, 0
    %p66 = por %p64, %p65
    %s68 = sadd.s32 %s67, 1
    %p71 = scmp.eq.s32.totalorder %s12, 3
    %p72 = scmp.ne.s32.totalorder %s67, %s69
    %p73 = scmp.eq.s32.totalorder %s12, 0
    %p74 = por %p72, %p73
    %p75 = scmp.ne.s32.totalorder %s67, %s69
    %p76 = scmp.eq.s32.totalorder %s17, 3
    %p77 = por %p75, %p76
    %p78 = scmp.ne.s32.totalorder %s69, %s70
    %p79 = scmp.eq.s32.totalorder %s17, 0
    %p80 = por %p78, %p79
    %p81 = scmp.ne.s32.totalorder %s69, %s70
    %p82 = scmp.eq.s32.totalorder %s18, 3
    %p83 = por %p81, %p82
    %p85 = scmp.ne.s32.totalorder %s70, %s84
    %p86 = scmp.eq.s32.totalorder %s18, 0
    %p87 = por %p85, %p86
    %s89 = sadd.s32 %s88, 1
    %p92 = scmp.eq.s32.totalorder %s12, 3
    %p93 = scmp.ne.s32.totalorder %s88, %s90
    %p94 = scmp.eq.s32.totalorder %s12, 0
    %p95 = por %p93, %p94
    %p96 = scmp.ne.s32.totalorder %s88, %s90
    %p97 = scmp.eq.s32.totalorder %s17, 3
    %p98 = por %p96, %p97
    %p99 = scmp.ne.s32.totalorder %s90, %s91
    %p100 = scmp.eq.s32.totalorder %s17, 0
    %p101 = por %p99, %p100
    %p102 = scmp.ne.s32.totalorder %s90, %s91
    %p103 = scmp.eq.s32.totalorder %s18, 3
    %p104 = por %p102, %p103
    %p106 = scmp.ne.s32.totalorder %s91, %s105
    %p107 = scmp.eq.s32.totalorder %s18, 0
    %p108 = por %p106, %p107
    %s110 = sadd.s32 %s109, 1
    %p113 = scmp.eq.s32.totalorder %s12, 3
    %p114 = scmp.ne.s32.totalorder %s109, %s111
    %p115 = scmp.eq.s32.totalorder %s12, 0
    %p116 = por %p114, %p115
    %p117 = scmp.ne.s32.totalorder %s109, %s111
    %p118 = scmp.eq.s32.totalorder %s17, 3
    %p119 = por %p117, %p118
    %p120 = scmp.ne.s32.totalorder %s111, %s112
    %p121 = scmp.eq.s32.totalorder %s17, 0
    %p122 = por %p120, %p121
    %p123 = scmp.ne.s32.totalorder %s111, %s112
    %p124 = scmp.eq.s32.totalorder %s18, 3
    %p125 = por %p123, %p124
    %p127 = scmp.ne.s32.totalorder %s112, %s126
    %p128 = scmp.eq.s32.totalorder %s18, 0
    %p129 = por %p127, %p128
    %s131 = sadd.s32 %s130, 1
    %p134 = scmp.eq.s32.totalorder %s12, 3
    %p135 = scmp.ne.s32.totalorder %s130, %s132
    %p136 = scmp.eq.s32.totalorder %s12, 0
    %p137 = por %p135, %p136
    %p138 = scmp.ne.s32.totalorder %s130, %s132
    %p139 = scmp.eq.s32.totalorder %s17, 3
    %p140 = por %p138, %p139
    %p141 = scmp.ne.s32.totalorder %s132, %s133
    %p142 = scmp.eq.s32.totalorder %s17, 0
    %p143 = por %p141, %p142
    %p144 = scmp.ne.s32.totalorder %s132, %s133
    %p145 = scmp.eq.s32.totalorder %s18, 3
    %p146 = por %p144, %p145
    %p148 = scmp.ne.s32.totalorder %s133, %s147
    %p149 = scmp.eq.s32.totalorder %s18, 0
    %p150 = por %p148, %p149
    %s151 = ssub.s32 %s12, %s19
    %p152 = scmp.eq.s32.totalorder %s151, 0
    %s154 = sadd.s32 %s153, 1
    %s155 = scalar_select %p152, %s153, %s154
    %p158 = pneg %p152
    %p159 = scmp.eq.s32.totalorder %s12, 3
    %p160 = por %p158, %p159
    %p161 = scmp.ne.s32.totalorder %s153, %s156
    %p162 = scmp.eq.s32.totalorder %s12, 0
    %p163 = por %p161, %p162
    %p164 = scmp.ne.s32.totalorder %s153, %s156
    %p165 = scmp.eq.s32.totalorder %s17, 3
    %p166 = por %p164, %p165
    %p167 = scmp.ne.s32.totalorder %s156, %s157
    %p168 = scmp.eq.s32.totalorder %s17, 0
    %p169 = por %p167, %p168
    %p170 = scmp.ne.s32.totalorder %s156, %s157
    %p171 = scmp.eq.s32.totalorder %s18, 3
    %p172 = por %p170, %p171
    %p174 = scmp.ne.s32.totalorder %s157, %s173
    %p175 = scmp.eq.s32.totalorder %s18, 0
    %p176 = por %p174, %p175
    %p177 = scmp.le.s32.totalorder 1, %s12
    %p178 = scmp.lt.s32.totalorder %s12, 5
    %p179 = pnand %p177, %p178
    %p180 = pneg %p179
    // Predicated region
    $region9: #{textcnn_forward.1} parent=5 // pred_check
      _
    $region10: #{textcnn_forward.1} parent=5 // pred_check_branch
      %182 = sbr.rel (%p179) target = $region12
    $region11: #{textcnn_forward.1} parent=5 // pred_region
      %s183 = ssub.s32 %s12, 1
      // Predicated region
      $region13: #{textcnn_forward.1} parent=11 // pred_check
        %p184 = pneg %p59
      $region14: #{textcnn_forward.1} parent=11 // pred_check_branch
        %186 = sbr.rel (%p184) target = $region16
      $region15: #{textcnn_forward.1} parent=11 // pred_region
        _
      $region16: #{textcnn_forward.1} parent=11 // pred_fallthru
        _
      // Predicated region
      $region17: #{textcnn_forward.1} parent=11 // pred_check
        %p187 = pneg %p80
      $region18: #{textcnn_forward.1} parent=11 // pred_check_branch
        %189 = sbr.rel (%p187) target = $region20
      $region19: #{textcnn_forward.1} parent=11 // pred_region
        _
      $region20: #{textcnn_forward.1} parent=11 // pred_fallthru
        _
      // Predicated region
      $region21: #{textcnn_forward.1} parent=11 // pred_check
        %p190 = pneg %p101
      $region22: #{textcnn_forward.1} parent=11 // pred_check_branch
        %192 = sbr.rel (%p190) target = $region24
      $region23: #{textcnn_forward.1} parent=11 // pred_region
        _
      $region24: #{textcnn_forward.1} parent=11 // pred_fallthru
        _
      // Predicated region
      $region25: #{textcnn_forward.1} parent=11 // pred_check
        %p193 = pneg %p122
      $region26: #{textcnn_forward.1} parent=11 // pred_check_branch
        %195 = sbr.rel (%p193) target = $region28
      $region27: #{textcnn_forward.1} parent=11 // pred_region
        _
      $region28: #{textcnn_forward.1} parent=11 // pred_fallthru
        _
      // Predicated region
      $region29: #{textcnn_forward.1} parent=11 // pred_check
        %p196 = pneg %p143
      $region30: #{textcnn_forward.1} parent=11 // pred_check_branch
        %198 = sbr.rel (%p196) target = $region32
      $region31: #{textcnn_forward.1} parent=11 // pred_region
        _
      $region32: #{textcnn_forward.1} parent=11 // pred_fallthru
        _
    $region12: #{textcnn_forward.1} parent=5 // pred_fallthru
      _
    %p199 = scmp.lt.s32.totalorder %s12, 4
    // Predicated region
    $region33: #{textcnn_forward.1} parent=5 // pred_check
      %p200 = pneg %p199
    $region34: #{textcnn_forward.1} parent=5 // pred_check_branch
      %202 = sbr.rel (%p200) target = $region36
    $region35: #{textcnn_forward.1} parent=5 // pred_region
      // Predicated region
      $region37: #{textcnn_forward.1} parent=35 // pred_check
        %p203 = pneg %p32
      $region38: #{textcnn_forward.1} parent=35 // pred_check_branch
        %205 = sbr.rel (%p203) target = $region40
      $region39: #{textcnn_forward.1} parent=35 // pred_region
        %s206 = smul.u32 2, %s12
        %p207 = scmp.lt.s32.totalorder %s206, 7
        %s208 = scalar_select %p207, %s206, 7
        %s209 = smul.addr %s208, 8
        %s210 = scalar_lea.vmem %s0, %s209
        %s211 = smul.u32 2, %s12
      $region40: #{textcnn_forward.1} parent=35 // pred_fallthru
        _
    $region36: #{textcnn_forward.1} parent=5 // pred_fallthru
      _
    %p212 = scmp.le.s32.totalorder 1, %s12
    %p213 = scmp.lt.s32.totalorder %s12, 5
    %p214 = pnand %p212, %p213
    %p215 = pneg %p214
    // Predicated region
    $region41: #{textcnn_forward.1} parent=5 // pred_check
      _
    $region42: #{textcnn_forward.1} parent=5 // pred_check_branch
      %217 = sbr.rel (%p214) target = $region44
    $region43: #{textcnn_forward.1} parent=5 // pred_region
      %s218 = ssub.s32 %s12, 1
      %s219 = smul.u32 2, %s17
      %p220 = scmp.lt.s32.totalorder %s219, 7
      %s221 = scalar_select %p220, %s219, 7
      %s222 = smul.addr %s221, 8
      %s223 = scalar_lea.vmem %s0, %s222
      %p224 = pneg %p38
      %p225 = pneg %p35
      %p226 = pneg %p59
      %p227 = pneg %p56
      %p228 = pneg %p80
      %p229 = pneg %p77
      %p230 = pneg %p101
      %p231 = pneg %p98
      %p232 = pneg %p122
      %p233 = pneg %p119
      %p234 = pneg %p143
      %p235 = pneg %p140
      %p236 = pneg %p169
      %p237 = pneg %p166
      %s238 = smul.u32 2, %s17
      %p239 = scmp.lt.s32.totalorder %s238, 7
      %s240 = scalar_select %p239, %s238, 7
      %s241 = smul.addr %s240, 8
      %s242 = scalar_lea.vmem %s6, %s241
      %s243 = smul.u32 2, %s17
      %p244 = scmp.lt.s32.totalorder %s243, 7
      %s245 = scalar_select %p244, %s243, 7
      %s246 = smul.addr %s245, 8
      %s247 = scalar_lea.vmem %s0, %s246
      %s248 = smul.u32 2, %s17
      %s249 = smul.u32 2, %s17
      %p250 = scmp.lt.s32.totalorder %s249, 7
      %s251 = scalar_select %p250, %s249, 7
      %s252 = smul.addr %s251, 8
      %s253 = scalar_lea.vmem %s6, %s252
      %s254 = smul.u32 2, %s17
      %v256 = vld [vmem:[%s247] sm:$0xff]
      %v257 = vld [vmem:[%s247 + $0x8] sm:$0xff]
      %v258 = vperm.slane %v256, 0
      %v259 = vlaneseq
      %v260 = vshrl.u32 %v259, 7
      %262 = vset.pattern.permute.xlu0 %v260
      %263 = vperm.xlu0 %262, %v258
      %v264 = vpop.permute.xlu0 %263
      %v265 = vlaneseq
      %v266 = vshrl.u32 %v265, 7
      %v267 = vadd.s32 %v266, 8
      %268 = vset.pattern.permute.xlu0 %v267
      %269 = vperm.xlu0 %268, %v258
      %v270 = vpop.permute.xlu0 %269
      %v271 = vperm.slane %v256, 1
      %v272 = vlaneseq
      %v273 = vshrl.u32 %v272, 7
      %275 = vset.pattern.permute.xlu0 %v273
      %276 = vperm.xlu0 %275, %v271
      %v277 = vpop.permute.xlu0 %276
      %v278 = vlaneseq
      %v279 = vshrl.u32 %v278, 7
      %v280 = vadd.s32 %v279, 8
      %281 = vset.pattern.permute.xlu0 %v280
      %282 = vperm.xlu0 %281, %v271
      %v283 = vpop.permute.xlu0 %282
      %v284 = vperm.slane %v256, 2
      %v285 = vlaneseq
      %v286 = vshrl.u32 %v285, 7
      %288 = vset.pattern.permute.xlu0 %v286
      %289 = vperm.xlu0 %288, %v284
      %v290 = vpop.permute.xlu0 %289
      %v291 = vlaneseq
      %v292 = vshrl.u32 %v291, 7
      %v293 = vadd.s32 %v292, 8
      %294 = vset.pattern.permute.xlu0 %v293
      %295 = vperm.xlu0 %294, %v284
      %v296 = vpop.permute.xlu0 %295
      %v297 = vperm.slane %v256, 3
      %v298 = vlaneseq
      %v299 = vshrl.u32 %v298, 7
      %301 = vset.pattern.permute.xlu0 %v299
      %302 = vperm.xlu0 %301, %v297
      %v303 = vpop.permute.xlu0 %302
      %v304 = vlaneseq
      %v305 = vshrl.u32 %v304, 7
      %v306 = vadd.s32 %v305, 8
      %307 = vset.pattern.permute.xlu0 %v306
      %308 = vperm.xlu0 %307, %v297
      %v309 = vpop.permute.xlu0 %308
      %v310 = vperm.slane %v256, 4
      %v311 = vlaneseq
      %v312 = vshrl.u32 %v311, 7
      %314 = vset.pattern.permute.xlu0 %v312
      %315 = vperm.xlu0 %314, %v310
      %v316 = vpop.permute.xlu0 %315
      %v317 = vlaneseq
      %v318 = vshrl.u32 %v317, 7
      %v319 = vadd.s32 %v318, 8
      %320 = vset.pattern.permute.xlu0 %v319
      %321 = vperm.xlu0 %320, %v310
      %v322 = vpop.permute.xlu0 %321
      %v323 = vperm.slane %v256, 5
      %v324 = vlaneseq
      %v325 = vshrl.u32 %v324, 7
      %327 = vset.pattern.permute.xlu0 %v325
      %328 = vperm.xlu0 %327, %v323
      %v329 = vpop.permute.xlu0 %328
      %v330 = vlaneseq
      %v331 = vshrl.u32 %v330, 7
      %v332 = vadd.s32 %v331, 8
      %333 = vset.pattern.permute.xlu0 %v332
      %334 = vperm.xlu0 %333, %v323
      %v335 = vpop.permute.xlu0 %334
      %v336 = vperm.slane %v256, 6
      %v337 = vlaneseq
      %v338 = vshrl.u32 %v337, 7
      %340 = vset.pattern.permute.xlu0 %v338
      %341 = vperm.xlu0 %340, %v336
      %v342 = vpop.permute.xlu0 %341
      %v343 = vlaneseq
      %v344 = vshrl.u32 %v343, 7
      %v345 = vadd.s32 %v344, 8
      %346 = vset.pattern.permute.xlu0 %v345
      %347 = vperm.xlu0 %346, %v336
      %v348 = vpop.permute.xlu0 %347
      %v349 = vperm.slane %v256, 7
      %v350 = vlaneseq
      %v351 = vshrl.u32 %v350, 7
      %353 = vset.pattern.permute.xlu0 %v351
      %354 = vperm.xlu0 %353, %v349
      %v355 = vpop.permute.xlu0 %354
      %v356 = vlaneseq
      %v357 = vshrl.u32 %v356, 7
      %v358 = vadd.s32 %v357, 8
      %359 = vset.pattern.permute.xlu0 %v358
      %360 = vperm.xlu0 %359, %v349
      %v361 = vpop.permute.xlu0 %360
      %v362 = vperm.slane %v257, 0
      %v363 = vlaneseq
      %v364 = vshrl.u32 %v363, 7
      %366 = vset.pattern.permute.xlu0 %v364
      %367 = vperm.xlu0 %366, %v362
      %v368 = vpop.permute.xlu0 %367
      %v369 = vlaneseq
      %v370 = vshrl.u32 %v369, 7
      %v371 = vadd.s32 %v370, 8
      %372 = vset.pattern.permute.xlu0 %v371
      %373 = vperm.xlu0 %372, %v362
      %v374 = vpop.permute.xlu0 %373
      %v375 = vperm.slane %v257, 1
      %v376 = vlaneseq
      %v377 = vshrl.u32 %v376, 7
      %379 = vset.pattern.permute.xlu0 %v377
      %380 = vperm.xlu0 %379, %v375
      %v381 = vpop.permute.xlu0 %380
      %v382 = vlaneseq
      %v383 = vshrl.u32 %v382, 7
      %v384 = vadd.s32 %v383, 8
      %385 = vset.pattern.permute.xlu0 %v384
      %386 = vperm.xlu0 %385, %v375
      %v387 = vpop.permute.xlu0 %386
      %v388 = vperm.slane %v257, 2
      %v389 = vlaneseq
      %v390 = vshrl.u32 %v389, 7
      %392 = vset.pattern.permute.xlu0 %v390
      %393 = vperm.xlu0 %392, %v388
      %v394 = vpop.permute.xlu0 %393
      %v395 = vlaneseq
      %v396 = vshrl.u32 %v395, 7
      %v397 = vadd.s32 %v396, 8
      %398 = vset.pattern.permute.xlu0 %v397
      %399 = vperm.xlu0 %398, %v388
      %v400 = vpop.permute.xlu0 %399
      %v401 = vperm.slane %v257, 3
      %v402 = vlaneseq
      %v403 = vshrl.u32 %v402, 7
      %405 = vset.pattern.permute.xlu0 %v403
      %406 = vperm.xlu0 %405, %v401
      %v407 = vpop.permute.xlu0 %406
      %v408 = vlaneseq
      %v409 = vshrl.u32 %v408, 7
      %v410 = vadd.s32 %v409, 8
      %411 = vset.pattern.permute.xlu0 %v410
      %412 = vperm.xlu0 %411, %v401
      %v413 = vpop.permute.xlu0 %412
      %v414 = vperm.slane %v257, 4
      %v415 = vlaneseq
      %v416 = vshrl.u32 %v415, 7
      %418 = vset.pattern.permute.xlu0 %v416
      %419 = vperm.xlu0 %418, %v414
      %v420 = vpop.permute.xlu0 %419
      %v421 = vlaneseq
      %v422 = vshrl.u32 %v421, 7
      %v423 = vadd.s32 %v422, 8
      %424 = vset.pattern.permute.xlu0 %v423
      %425 = vperm.xlu0 %424, %v414
      %v426 = vpop.permute.xlu0 %425
      %v427 = vperm.slane %v257, 5
      %v428 = vlaneseq
      %v429 = vshrl.u32 %v428, 7
      %431 = vset.pattern.permute.xlu0 %v429
      %432 = vperm.xlu0 %431, %v427
      %v433 = vpop.permute.xlu0 %432
      %v434 = vlaneseq
      %v435 = vshrl.u32 %v434, 7
      %v436 = vadd.s32 %v435, 8
      %437 = vset.pattern.permute.xlu0 %v436
      %438 = vperm.xlu0 %437, %v427
      %v439 = vpop.permute.xlu0 %438
      %v440 = vperm.slane %v257, 6
      %v441 = vlaneseq
      %v442 = vshrl.u32 %v441, 7
      %444 = vset.pattern.permute.xlu0 %v442
      %445 = vperm.xlu0 %444, %v440
      %v446 = vpop.permute.xlu0 %445
      %v447 = vlaneseq
      %v448 = vshrl.u32 %v447, 7
      %v449 = vadd.s32 %v448, 8
      %450 = vset.pattern.permute.xlu0 %v449
      %451 = vperm.xlu0 %450, %v440
      %v452 = vpop.permute.xlu0 %451
      %v453 = vperm.slane %v257, 7
      %v454 = vlaneseq
      %v455 = vshrl.u32 %v454, 7
      %457 = vset.pattern.permute.xlu0 %v455
      %458 = vperm.xlu0 %457, %v453
      %v459 = vpop.permute.xlu0 %458
      %v460 = vlaneseq
      %v461 = vshrl.u32 %v460, 7
      %v462 = vadd.s32 %v461, 8
      %463 = vset.pattern.permute.xlu0 %v462
      %464 = vperm.xlu0 %463, %v453
      %v465 = vpop.permute.xlu0 %464
      %v466 = vlaneseq
      %v467 = vand.u32 %v466, 127
      %vm468 = vcmp.eq.s32.totalorder %v264, %v467
      %vm469 = vcmp.eq.s32.totalorder %v270, %v467
      %vm470 = vcmp.eq.s32.totalorder %v277, %v467
      %vm471 = vcmp.eq.s32.totalorder %v283, %v467
      %vm472 = vcmp.eq.s32.totalorder %v290, %v467
      %vm473 = vcmp.eq.s32.totalorder %v296, %v467
      %vm474 = vcmp.eq.s32.totalorder %v303, %v467
      %vm475 = vcmp.eq.s32.totalorder %v309, %v467
      %vm476 = vcmp.eq.s32.totalorder %v316, %v467
      %vm477 = vcmp.eq.s32.totalorder %v322, %v467
      %vm478 = vcmp.eq.s32.totalorder %v329, %v467
      %vm479 = vcmp.eq.s32.totalorder %v335, %v467
      %vm480 = vcmp.eq.s32.totalorder %v342, %v467
      %vm481 = vcmp.eq.s32.totalorder %v348, %v467
      %vm482 = vcmp.eq.s32.totalorder %v355, %v467
      %vm483 = vcmp.eq.s32.totalorder %v361, %v467
      %vm484 = vcmp.eq.s32.totalorder %v368, %v467
      %vm485 = vcmp.eq.s32.totalorder %v374, %v467
      %vm486 = vcmp.eq.s32.totalorder %v381, %v467
      %vm487 = vcmp.eq.s32.totalorder %v387, %v467
      %vm488 = vcmp.eq.s32.totalorder %v394, %v467
      %vm489 = vcmp.eq.s32.totalorder %v400, %v467
      %vm490 = vcmp.eq.s32.totalorder %v407, %v467
      %vm491 = vcmp.eq.s32.totalorder %v413, %v467
      %vm492 = vcmp.eq.s32.totalorder %v420, %v467
      %vm493 = vcmp.eq.s32.totalorder %v426, %v467
      %vm494 = vcmp.eq.s32.totalorder %v433, %v467
      %vm495 = vcmp.eq.s32.totalorder %v439, %v467
      %vm496 = vcmp.eq.s32.totalorder %v446, %v467
      %vm497 = vcmp.eq.s32.totalorder %v452, %v467
      %vm498 = vcmp.eq.s32.totalorder %v459, %v467
      %vm499 = vcmp.eq.s32.totalorder %v465, %v467
      %v500 = vsel %vm468, 1, 0
      %v501 = vsel %vm469, 1, 0
      %v502 = vsel %vm470, 1, 0
      %v503 = vsel %vm471, 1, 0
      %v504 = vsel %vm472, 1, 0
      %v505 = vsel %vm473, 1, 0
      %v506 = vsel %vm474, 1, 0
      %v507 = vsel %vm475, 1, 0
      %v508 = vsel %vm476, 1, 0
      %v509 = vsel %vm477, 1, 0
      %v510 = vsel %vm478, 1, 0
      %v511 = vsel %vm479, 1, 0
      %v512 = vsel %vm480, 1, 0
      %v513 = vsel %vm481, 1, 0
      %v514 = vsel %vm482, 1, 0
      %v515 = vsel %vm483, 1, 0
      %v516 = vsel %vm484, 1, 0
      %v517 = vsel %vm485, 1, 0
      %v518 = vsel %vm486, 1, 0
      %v519 = vsel %vm487, 1, 0
      %v520 = vsel %vm488, 1, 0
      %v521 = vsel %vm489, 1, 0
      %v522 = vsel %vm490, 1, 0
      %v523 = vsel %vm491, 1, 0
      %v524 = vsel %vm492, 1, 0
      %v525 = vsel %vm493, 1, 0
      %v526 = vsel %vm494, 1, 0
      %v527 = vsel %vm495, 1, 0
      %v528 = vsel %vm496, 1, 0
      %v529 = vsel %vm497, 1, 0
      %v530 = vsel %vm498, 1, 0
      %v531 = vsel %vm499, 1, 0
      %v532 = vcvt.s32.f32 %v500
      %v533 = vcvt.s32.f32 %v501
      %v534 = vcvt.s32.f32 %v502
      %v535 = vcvt.s32.f32 %v503
      %v536 = vcvt.s32.f32 %v504
      %v537 = vcvt.s32.f32 %v505
      %v538 = vcvt.s32.f32 %v506
      %v539 = vcvt.s32.f32 %v507
      %v540 = vcvt.s32.f32 %v508
      %v541 = vcvt.s32.f32 %v509
      %v542 = vcvt.s32.f32 %v510
      %v543 = vcvt.s32.f32 %v511
      %v544 = vcvt.s32.f32 %v512
      %v545 = vcvt.s32.f32 %v513
      %v546 = vcvt.s32.f32 %v514
      %v547 = vcvt.s32.f32 %v515
      %v548 = vcvt.s32.f32 %v516
      %v549 = vcvt.s32.f32 %v517
      %v550 = vcvt.s32.f32 %v518
      %v551 = vcvt.s32.f32 %v519
      %v552 = vcvt.s32.f32 %v520
      %v553 = vcvt.s32.f32 %v521
      %v554 = vcvt.s32.f32 %v522
      %v555 = vcvt.s32.f32 %v523
      %v556 = vcvt.s32.f32 %v524
      %v557 = vcvt.s32.f32 %v525
      %v558 = vcvt.s32.f32 %v526
      %v559 = vcvt.s32.f32 %v527
      %v560 = vcvt.s32.f32 %v528
      %v561 = vcvt.s32.f32 %v529
      %v562 = vcvt.s32.f32 %v530
      %v563 = vcvt.s32.f32 %v531
      %v564 = vpack.c.bf16 %v532, %v532
      %v565 = vpack.c.bf16 %v533, %v533
      %v566 = vpack.c.bf16 %v534, %v534
      %v567 = vpack.c.bf16 %v535, %v535
      %v568 = vpack.c.bf16 %v536, %v536
      %v569 = vpack.c.bf16 %v537, %v537
      %v570 = vpack.c.bf16 %v538, %v538
      %v571 = vpack.c.bf16 %v539, %v539
      %v572 = vpack.c.bf16 %v540, %v540
      %v573 = vpack.c.bf16 %v541, %v541
      %v574 = vpack.c.bf16 %v542, %v542
      %v575 = vpack.c.bf16 %v543, %v543
      %v576 = vpack.c.bf16 %v544, %v544
      %v577 = vpack.c.bf16 %v545, %v545
      %v578 = vpack.c.bf16 %v546, %v546
      %v579 = vpack.c.bf16 %v547, %v547
      %v580 = vpack.c.bf16 %v548, %v548
      %v581 = vpack.c.bf16 %v549, %v549
      %v582 = vpack.c.bf16 %v550, %v550
      %v583 = vpack.c.bf16 %v551, %v551
      %v584 = vpack.c.bf16 %v552, %v552
      %v585 = vpack.c.bf16 %v553, %v553
      %v586 = vpack.c.bf16 %v554, %v554
      %v587 = vpack.c.bf16 %v555, %v555
      %v588 = vpack.c.bf16 %v556, %v556
      %v589 = vpack.c.bf16 %v557, %v557
      %v590 = vpack.c.bf16 %v558, %v558
      %v591 = vpack.c.bf16 %v559, %v559
      %v592 = vpack.c.bf16 %v560, %v560
      %v593 = vpack.c.bf16 %v561, %v561
      %v594 = vpack.c.bf16 %v562, %v562
      %v595 = vpack.c.bf16 %v563, %v563
      %v596 = vld [vmem:[%s1] sm:$0xf]
      %v597 = vld [vmem:[%s1 + $0x4] sm:$0xf]
      %v598 = vld [vmem:[%s1 + $0x8] sm:$0xf]
      %v599 = vld [vmem:[%s1 + $0xc] sm:$0xf]
      %v600 = vld [vmem:[%s1 + $0x10] sm:$0xf]
      %v601 = vld [vmem:[%s1 + $0x14] sm:$0xf]
      %v602 = vld [vmem:[%s1 + $0x18] sm:$0xf]
      %v635 = vunpack.c.l.b16 %v564
      %v636 = vunpack.c.l.b16 %v565
      %v637 = vunpack.c.l.b16 %v566
      %v638 = vunpack.c.l.b16 %v567
      %v639 = vunpack.c.l.b16 %v568
      %v640 = vunpack.c.l.b16 %v569
      %v641 = vunpack.c.l.b16 %v570
      %v642 = vunpack.c.l.b16 %v571
      %v643 = vunpack.c.l.b16 %v572
      %v644 = vunpack.c.l.b16 %v573
      %v645 = vunpack.c.l.b16 %v574
      %v646 = vunpack.c.l.b16 %v575
      %v647 = vunpack.c.l.b16 %v576
      %v648 = vunpack.c.l.b16 %v577
      %v649 = vunpack.c.l.b16 %v578
      %v650 = vunpack.c.l.b16 %v579
      %v651 = vunpack.c.l.b16 %v580
      %v652 = vunpack.c.l.b16 %v581
      %v653 = vunpack.c.l.b16 %v582
      %v654 = vunpack.c.l.b16 %v583
      %v655 = vunpack.c.l.b16 %v584
      %v656 = vunpack.c.l.b16 %v585
      %v657 = vunpack.c.l.b16 %v586
      %v658 = vunpack.c.l.b16 %v587
      %v659 = vunpack.c.l.b16 %v588
      %v660 = vunpack.c.l.b16 %v589
      %v661 = vunpack.c.l.b16 %v590
      %v662 = vunpack.c.l.b16 %v591
      %v663 = vunpack.c.l.b16 %v592
      %v664 = vunpack.c.l.b16 %v593
      %v665 = vunpack.c.l.b16 %v594
      %v666 = vunpack.c.l.b16 %v595
      %v667 = vpack.c.b16 %v636, %v635
      %v668 = vpack.c.b16 %v638, %v637
      %v669 = vpack.c.b16 %v640, %v639
      %v670 = vpack.c.b16 %v642, %v641
      %v671 = vpack.c.b16 %v644, %v643
      %v672 = vpack.c.b16 %v646, %v645
      %v673 = vpack.c.b16 %v648, %v647
      %v674 = vpack.c.b16 %v650, %v649
      %v675 = vpack.c.b16 %v652, %v651
      %v676 = vpack.c.b16 %v654, %v653
      %v677 = vpack.c.b16 %v656, %v655
      %v678 = vpack.c.b16 %v658, %v657
      %v679 = vpack.c.b16 %v660, %v659
      %v680 = vpack.c.b16 %v662, %v661
      %v681 = vpack.c.b16 %v664, %v663
      %v682 = vpack.c.b16 %v666, %v665
      %v690 = vunpack.c.l.b16 %v596
      %v691 = vunpack.c.l.b16 %v597
      %v692 = vunpack.c.l.b16 %v598
      %v693 = vunpack.c.l.b16 %v599
      %v694 = vunpack.c.l.b16 %v600
      %v695 = vunpack.c.l.b16 %v601
      %v696 = vunpack.c.l.b16 %v602
      %v697 = vpack.c.b16 %v691, %v690
      %v698 = vpack.c.b16 %v693, %v692
      %v699 = vpack.c.b16 %v695, %v694
      %v700 = vpack.c.b16 %v696, %v696
      %vm704 = vcmask 457728
      %v706 = vsel %vm704, %v667, 0
      %v709 = vsel %vm704, %v668, 0
      %v712 = vsel %vm704, %v669, 0
      %v715 = vsel %vm704, %v670, 0
      %v718 = vsel %vm704, %v671, 0
      %v721 = vsel %vm704, %v672, 0
      %v724 = vsel %vm704, %v673, 0
      %v727 = vsel %vm704, %v674, 0
      %v730 = vsel %vm704, %v675, 0
      %v733 = vsel %vm704, %v676, 0
      %v736 = vsel %vm704, %v677, 0
      %v739 = vsel %vm704, %v678, 0
      %v742 = vsel %vm704, %v679, 0
      %v745 = vsel %vm704, %v680, 0
      %v748 = vsel %vm704, %v681, 0
      %v751 = vsel %vm704, %v682, 0
      %vm753 = vcmask 1043456
      %v755 = vsel %vm753, %v700, 0
      %757 = vmatpush.bf16.msra.mxu0 0
      %758 = vmatpush.bf16.msra.mxu0 0
      %759 = vmatpush.bf16.msra.mxu0 0
      %760 = vmatpush.bf16.msra.mxu0 0
      %761 = vmatpush.bf16.msra.mxu0 %v755
      %762 = vmatpush.bf16.msra.mxu0 %v699
      %763 = vmatpush.bf16.msra.mxu0 %v698
      %764 = vmatpush.bf16.msra.mxu0 %v697
      %765 = vmatmul.bf16.gmra.mxu0 %v706
      %v766 = vpop.f32.mrf.mxu0
      %v767 = vadd.f32 0.0, %v766
      %v768 = vpop.f32.mrf.mxu0
      %v769 = vadd.f32 0.0, %v768
      %770 = vmatmul.bf16.gmra.mxu0 %v709
      %v771 = vpop.f32.mrf.mxu0
      %v772 = vadd.f32 0.0, %v771
      %v773 = vpop.f32.mrf.mxu0
      %v774 = vadd.f32 0.0, %v773
      %775 = vmatmul.bf16.gmra.mxu0 %v712
      %v776 = vpop.f32.mrf.mxu0
      %v777 = vadd.f32 0.0, %v776
      %v778 = vpop.f32.mrf.mxu0
      %v779 = vadd.f32 0.0, %v778
      %780 = vmatmul.bf16.gmra.mxu0 %v715
      %v781 = vpop.f32.mrf.mxu0
      %v782 = vadd.f32 0.0, %v781
      %v783 = vpop.f32.mrf.mxu0
      %v784 = vadd.f32 0.0, %v783
      %785 = vmatmul.bf16.gmra.mxu0 %v718
      %v786 = vpop.f32.mrf.mxu0
      %v787 = vadd.f32 0.0, %v786
      %v788 = vpop.f32.mrf.mxu0
      %v789 = vadd.f32 0.0, %v788
      %790 = vmatmul.bf16.gmra.mxu0 %v721
      %v791 = vpop.f32.mrf.mxu0
      %v792 = vadd.f32 0.0, %v791
      %v793 = vpop.f32.mrf.mxu0
      %v794 = vadd.f32 0.0, %v793
      %795 = vmatmul.bf16.gmra.mxu0 %v724
      %v796 = vpop.f32.mrf.mxu0
      %v797 = vadd.f32 0.0, %v796
      %v798 = vpop.f32.mrf.mxu0
      %v799 = vadd.f32 0.0, %v798
      %800 = vmatmul.bf16.gmra.mxu0 %v727
      %v801 = vpop.f32.mrf.mxu0
      %v802 = vadd.f32 0.0, %v801
      %v803 = vpop.f32.mrf.mxu0
      %v804 = vadd.f32 0.0, %v803
      %805 = vmatmul.bf16.gmra.mxu0 %v730
      %v806 = vpop.f32.mrf.mxu0
      %v807 = vadd.f32 0.0, %v806
      %v808 = vpop.f32.mrf.mxu0
      %v809 = vadd.f32 0.0, %v808
      %810 = vmatmul.bf16.gmra.mxu0 %v733
      %v811 = vpop.f32.mrf.mxu0
      %v812 = vadd.f32 0.0, %v811
      %v813 = vpop.f32.mrf.mxu0
      %v814 = vadd.f32 0.0, %v813
      %815 = vmatmul.bf16.gmra.mxu0 %v736
      %v816 = vpop.f32.mrf.mxu0
      %v817 = vadd.f32 0.0, %v816
      %v818 = vpop.f32.mrf.mxu0
      %v819 = vadd.f32 0.0, %v818
      %820 = vmatmul.bf16.gmra.mxu0 %v739
      %v821 = vpop.f32.mrf.mxu0
      %v822 = vadd.f32 0.0, %v821
      %v823 = vpop.f32.mrf.mxu0
      %v824 = vadd.f32 0.0, %v823
      %825 = vmatmul.bf16.gmra.mxu0 %v742
      %v826 = vpop.f32.mrf.mxu0
      %v827 = vadd.f32 0.0, %v826
      %v828 = vpop.f32.mrf.mxu0
      %v829 = vadd.f32 0.0, %v828
      %830 = vmatmul.bf16.gmra.mxu0 %v745
      %v831 = vpop.f32.mrf.mxu0
      %v832 = vadd.f32 0.0, %v831
      %v833 = vpop.f32.mrf.mxu0
      %v834 = vadd.f32 0.0, %v833
      %835 = vmatmul.bf16.gmra.mxu0 %v748
      %v836 = vpop.f32.mrf.mxu0
      %v837 = vadd.f32 0.0, %v836
      %v838 = vpop.f32.mrf.mxu0
      %v839 = vadd.f32 0.0, %v838
      %840 = vmatmul.bf16.gmra.mxu0 %v751
      %v841 = vpop.f32.mrf.mxu0
      %v842 = vadd.f32 0.0, %v841
      %v843 = vpop.f32.mrf.mxu0
      %v844 = vadd.f32 0.0, %v843
      %845 = vdwg.mxu0
      %v846 = vpack.c.bf16 %v767, %v767
      %v847 = vpack.c.bf16 %v769, %v769
      %v848 = vpack.c.bf16 %v772, %v772
      %v849 = vpack.c.bf16 %v774, %v774
      %v850 = vpack.c.bf16 %v777, %v777
      %v851 = vpack.c.bf16 %v779, %v779
      %v852 = vpack.c.bf16 %v782, %v782
      %v853 = vpack.c.bf16 %v784, %v784
      %v854 = vpack.c.bf16 %v787, %v787
      %v855 = vpack.c.bf16 %v789, %v789
      %v856 = vpack.c.bf16 %v792, %v792
      %v857 = vpack.c.bf16 %v794, %v794
      %v858 = vpack.c.bf16 %v797, %v797
      %v859 = vpack.c.bf16 %v799, %v799
      %v860 = vpack.c.bf16 %v802, %v802
      %v861 = vpack.c.bf16 %v804, %v804
      %v862 = vpack.c.bf16 %v807, %v807
      %v863 = vpack.c.bf16 %v809, %v809
      %v864 = vpack.c.bf16 %v812, %v812
      %v865 = vpack.c.bf16 %v814, %v814
      %v866 = vpack.c.bf16 %v817, %v817
      %v867 = vpack.c.bf16 %v819, %v819
      %v868 = vpack.c.bf16 %v822, %v822
      %v869 = vpack.c.bf16 %v824, %v824
      %v870 = vpack.c.bf16 %v827, %v827
      %v871 = vpack.c.bf16 %v829, %v829
      %v872 = vpack.c.bf16 %v832, %v832
      %v873 = vpack.c.bf16 %v834, %v834
      %v874 = vpack.c.bf16 %v837, %v837
      %v875 = vpack.c.bf16 %v839, %v839
      %v876 = vpack.c.bf16 %v842, %v842
      %v877 = vpack.c.bf16 %v844, %v844
      %v910 = vunpack.c.l.b16 %v846
      %v911 = vunpack.c.l.b16 %v847
      %v912 = vunpack.c.l.b16 %v848
      %v913 = vunpack.c.l.b16 %v849
      %v914 = vunpack.c.l.b16 %v850
      %v915 = vunpack.c.l.b16 %v851
      %v916 = vunpack.c.l.b16 %v852
      %v917 = vunpack.c.l.b16 %v853
      %v918 = vunpack.c.l.b16 %v854
      %v919 = vunpack.c.l.b16 %v855
      %v920 = vunpack.c.l.b16 %v856
      %v921 = vunpack.c.l.b16 %v857
      %v922 = vunpack.c.l.b16 %v858
      %v923 = vunpack.c.l.b16 %v859
      %v924 = vunpack.c.l.b16 %v860
      %v925 = vunpack.c.l.b16 %v861
      %v926 = vunpack.c.l.b16 %v862
      %v927 = vunpack.c.l.b16 %v863
      %v928 = vunpack.c.l.b16 %v864
      %v929 = vunpack.c.l.b16 %v865
      %v930 = vunpack.c.l.b16 %v866
      %v931 = vunpack.c.l.b16 %v867
      %v932 = vunpack.c.l.b16 %v868
      %v933 = vunpack.c.l.b16 %v869
      %v934 = vunpack.c.l.b16 %v870
      %v935 = vunpack.c.l.b16 %v871
      %v936 = vunpack.c.l.b16 %v872
      %v937 = vunpack.c.l.b16 %v873
      %v938 = vunpack.c.l.b16 %v874
      %v939 = vunpack.c.l.b16 %v875
      %v940 = vunpack.c.l.b16 %v876
      %v941 = vunpack.c.l.b16 %v877
      %v942 = vpack.c.b16 %v911, %v910
      %v943 = vpack.c.b16 %v913, %v912
      %v944 = vpack.c.b16 %v915, %v914
      %v945 = vpack.c.b16 %v917, %v916
      %v946 = vpack.c.b16 %v919, %v918
      %v947 = vpack.c.b16 %v921, %v920
      %v948 = vpack.c.b16 %v923, %v922
      %v949 = vpack.c.b16 %v925, %v924
      %v950 = vpack.c.b16 %v927, %v926
      %v951 = vpack.c.b16 %v929, %v928
      %v952 = vpack.c.b16 %v931, %v930
      %v953 = vpack.c.b16 %v933, %v932
      %v954 = vpack.c.b16 %v935, %v934
      %v955 = vpack.c.b16 %v937, %v936
      %v956 = vpack.c.b16 %v939, %v938
      %v957 = vpack.c.b16 %v941, %v940
      %v959 = vshrl.u32 %v942, 16
      %v961 = vshll.u32 %v942, 16
      %v963 = vrot.slane %v961, 1
      %v964 = vor.u32 %v959, %v963
      %v966 = vshrl.u32 %v943, 16
      %v968 = vshll.u32 %v943, 16
      %v970 = vrot.slane %v968, 1
      %v971 = vor.u32 %v966, %v970
      %v973 = vshrl.u32 %v944, 16
      %v975 = vshll.u32 %v944, 16
      %v977 = vrot.slane %v975, 1
      %v978 = vor.u32 %v973, %v977
      %v980 = vshrl.u32 %v945, 16
      %v982 = vshll.u32 %v945, 16
      %v984 = vrot.slane %v982, 1
      %v985 = vor.u32 %v980, %v984
      %v987 = vshrl.u32 %v946, 16
      %v989 = vshll.u32 %v946, 16
      %v991 = vrot.slane %v989, 1
      %v992 = vor.u32 %v987, %v991
      %v994 = vshrl.u32 %v947, 16
      %v996 = vshll.u32 %v947, 16
      %v998 = vrot.slane %v996, 1
      %v999 = vor.u32 %v994, %v998
      %v1001 = vshrl.u32 %v948, 16
      %v1003 = vshll.u32 %v948, 16
      %v1005 = vrot.slane %v1003, 1
      %v1006 = vor.u32 %v1001, %v1005
      %v1008 = vshrl.u32 %v949, 16
      %v1010 = vshll.u32 %v949, 16
      %v1012 = vrot.slane %v1010, 1
      %v1013 = vor.u32 %v1008, %v1012
      %v1015 = vshrl.u32 %v950, 16
      %v1017 = vshll.u32 %v950, 16
      %v1019 = vrot.slane %v1017, 1
      %v1020 = vor.u32 %v1015, %v1019
      %v1022 = vshrl.u32 %v951, 16
      %v1024 = vshll.u32 %v951, 16
      %v1026 = vrot.slane %v1024, 1
      %v1027 = vor.u32 %v1022, %v1026
      %v1029 = vshrl.u32 %v952, 16
      %v1031 = vshll.u32 %v952, 16
      %v1033 = vrot.slane %v1031, 1
      %v1034 = vor.u32 %v1029, %v1033
      %v1036 = vshrl.u32 %v953, 16
      %v1038 = vshll.u32 %v953, 16
      %v1040 = vrot.slane %v1038, 1
      %v1041 = vor.u32 %v1036, %v1040
      %v1043 = vshrl.u32 %v954, 16
      %v1045 = vshll.u32 %v954, 16
      %v1047 = vrot.slane %v1045, 1
      %v1048 = vor.u32 %v1043, %v1047
      %v1050 = vshrl.u32 %v955, 16
      %v1052 = vshll.u32 %v955, 16
      %v1054 = vrot.slane %v1052, 1
      %v1055 = vor.u32 %v1050, %v1054
      %v1057 = vshrl.u32 %v956, 16
      %v1059 = vshll.u32 %v956, 16
      %v1061 = vrot.slane %v1059, 1
      %v1062 = vor.u32 %v1057, %v1061
      %v1064 = vshrl.u32 %v957, 16
      %v1066 = vshll.u32 %v957, 16
      %v1068 = vrot.slane %v1066, 1
      %v1069 = vor.u32 %v1064, %v1068
      %1070 = vrot.lane.b32.xlu0 %v964, 32
      %v1071 = vpop.permute.xlu0 %1070
      %1072 = vrot.lane.b32.xlu0 %v971, 32
      %v1073 = vpop.permute.xlu0 %1072
      %1074 = vrot.lane.b32.xlu0 %v978, 32
      %v1075 = vpop.permute.xlu0 %1074
      %1076 = vrot.lane.b32.xlu0 %v985, 32
      %v1077 = vpop.permute.xlu0 %1076
      %1078 = vrot.lane.b32.xlu0 %v992, 32
      %v1079 = vpop.permute.xlu0 %1078
      %1080 = vrot.lane.b32.xlu0 %v999, 32
      %v1081 = vpop.permute.xlu0 %1080
      %1082 = vrot.lane.b32.xlu0 %v1006, 32
      %v1083 = vpop.permute.xlu0 %1082
      %1084 = vrot.lane.b32.xlu0 %v1013, 32
      %v1085 = vpop.permute.xlu0 %1084
      %1086 = vrot.lane.b32.xlu0 %v1020, 32
      %v1087 = vpop.permute.xlu0 %1086
      %1088 = vrot.lane.b32.xlu0 %v1027, 32
      %v1089 = vpop.permute.xlu0 %1088
      %1090 = vrot.lane.b32.xlu0 %v1034, 32
      %v1091 = vpop.permute.xlu0 %1090
      %1092 = vrot.lane.b32.xlu0 %v1041, 32
      %v1093 = vpop.permute.xlu0 %1092
      %1094 = vrot.lane.b32.xlu0 %v1048, 32
      %v1095 = vpop.permute.xlu0 %1094
      %1096 = vrot.lane.b32.xlu0 %v1055, 32
      %v1097 = vpop.permute.xlu0 %1096
      %1098 = vrot.lane.b32.xlu0 %v1062, 32
      %v1099 = vpop.permute.xlu0 %1098
      %1100 = vrot.lane.b32.xlu0 %v1069, 32
      %v1101 = vpop.permute.xlu0 %1100
      %v1102 = vrot.slane %v942, 1
      %v1103 = vrot.slane %v943, 1
      %v1104 = vrot.slane %v944, 1
      %v1105 = vrot.slane %v945, 1
      %v1106 = vrot.slane %v946, 1
      %v1107 = vrot.slane %v947, 1
      %v1108 = vrot.slane %v948, 1
      %v1109 = vrot.slane %v949, 1
      %v1110 = vrot.slane %v950, 1
      %v1111 = vrot.slane %v951, 1
      %v1112 = vrot.slane %v952, 1
      %v1113 = vrot.slane %v953, 1
      %v1114 = vrot.slane %v954, 1
      %v1115 = vrot.slane %v955, 1
      %v1116 = vrot.slane %v956, 1
      %v1117 = vrot.slane %v957, 1
      %1118 = vrot.lane.b32.xlu0 %v1102, 64
      %v1119 = vpop.permute.xlu0 %1118
      %1120 = vrot.lane.b32.xlu0 %v1103, 64
      %v1121 = vpop.permute.xlu0 %1120
      %1122 = vrot.lane.b32.xlu0 %v1104, 64
      %v1123 = vpop.permute.xlu0 %1122
      %1124 = vrot.lane.b32.xlu0 %v1105, 64
      %v1125 = vpop.permute.xlu0 %1124
      %1126 = vrot.lane.b32.xlu0 %v1106, 64
      %v1127 = vpop.permute.xlu0 %1126
      %1128 = vrot.lane.b32.xlu0 %v1107, 64
      %v1129 = vpop.permute.xlu0 %1128
      %1130 = vrot.lane.b32.xlu0 %v1108, 64
      %v1131 = vpop.permute.xlu0 %1130
      %1132 = vrot.lane.b32.xlu0 %v1109, 64
      %v1133 = vpop.permute.xlu0 %1132
      %1134 = vrot.lane.b32.xlu0 %v1110, 64
      %v1135 = vpop.permute.xlu0 %1134
      %1136 = vrot.lane.b32.xlu0 %v1111, 64
      %v1137 = vpop.permute.xlu0 %1136
      %1138 = vrot.lane.b32.xlu0 %v1112, 64
      %v1139 = vpop.permute.xlu0 %1138
      %1140 = vrot.lane.b32.xlu0 %v1113, 64
      %v1141 = vpop.permute.xlu0 %1140
      %1142 = vrot.lane.b32.xlu0 %v1114, 64
      %v1143 = vpop.permute.xlu0 %1142
      %1144 = vrot.lane.b32.xlu0 %v1115, 64
      %v1145 = vpop.permute.xlu0 %1144
      %1146 = vrot.lane.b32.xlu0 %v1116, 64
      %v1147 = vpop.permute.xlu0 %1146
      %1148 = vrot.lane.b32.xlu0 %v1117, 64
      %v1149 = vpop.permute.xlu0 %1148
      %v1150 = vrot.slane %v959, 1
      %v1151 = vrot.slane %v961, 2
      %v1152 = vor.u32 %v1150, %v1151
      %v1153 = vrot.slane %v966, 1
      %v1154 = vrot.slane %v968, 2
      %v1155 = vor.u32 %v1153, %v1154
      %v1156 = vrot.slane %v973, 1
      %v1157 = vrot.slane %v975, 2
      %v1158 = vor.u32 %v1156, %v1157
      %v1159 = vrot.slane %v980, 1
      %v1160 = vrot.slane %v982, 2
      %v1161 = vor.u32 %v1159, %v1160
      %v1162 = vrot.slane %v987, 1
      %v1163 = vrot.slane %v989, 2
      %v1164 = vor.u32 %v1162, %v1163
      %v1165 = vrot.slane %v994, 1
      %v1166 = vrot.slane %v996, 2
      %v1167 = vor.u32 %v1165, %v1166
      %v1168 = vrot.slane %v1001, 1
      %v1169 = vrot.slane %v1003, 2
      %v1170 = vor.u32 %v1168, %v1169
      %v1171 = vrot.slane %v1008, 1
      %v1172 = vrot.slane %v1010, 2
      %v1173 = vor.u32 %v1171, %v1172
      %v1174 = vrot.slane %v1015, 1
      %v1175 = vrot.slane %v1017, 2
      %v1176 = vor.u32 %v1174, %v1175
      %v1177 = vrot.slane %v1022, 1
      %v1178 = vrot.slane %v1024, 2
      %v1179 = vor.u32 %v1177, %v1178
      %v1180 = vrot.slane %v1029, 1
      %v1181 = vrot.slane %v1031, 2
      %v1182 = vor.u32 %v1180, %v1181
      %v1183 = vrot.slane %v1036, 1
      %v1184 = vrot.slane %v1038, 2
      %v1185 = vor.u32 %v1183, %v1184
      %v1186 = vrot.slane %v1043, 1
      %v1187 = vrot.slane %v1045, 2
      %v1188 = vor.u32 %v1186, %v1187
      %v1189 = vrot.slane %v1050, 1
      %v1190 = vrot.slane %v1052, 2
      %v1191 = vor.u32 %v1189, %v1190
      %v1192 = vrot.slane %v1057, 1
      %v1193 = vrot.slane %v1059, 2
      %v1194 = vor.u32 %v1192, %v1193
      %v1195 = vrot.slane %v1064, 1
      %v1196 = vrot.slane %v1066, 2
      %v1197 = vor.u32 %v1195, %v1196
      %1198 = vrot.lane.b32.xlu0 %v1152, 96
      %v1199 = vpop.permute.xlu0 %1198
      %1200 = vrot.lane.b32.xlu0 %v1155, 96
      %v1201 = vpop.permute.xlu0 %1200
      %1202 = vrot.lane.b32.xlu0 %v1158, 96
      %v1203 = vpop.permute.xlu0 %1202
      %1204 = vrot.lane.b32.xlu0 %v1161, 96
      %v1205 = vpop.permute.xlu0 %1204
      %1206 = vrot.lane.b32.xlu0 %v1164, 96
      %v1207 = vpop.permute.xlu0 %1206
      %1208 = vrot.lane.b32.xlu0 %v1167, 96
      %v1209 = vpop.permute.xlu0 %1208
      %1210 = vrot.lane.b32.xlu0 %v1170, 96
      %v1211 = vpop.permute.xlu0 %1210
      %1212 = vrot.lane.b32.xlu0 %v1173, 96
      %v1213 = vpop.permute.xlu0 %1212
      %1214 = vrot.lane.b32.xlu0 %v1176, 96
      %v1215 = vpop.permute.xlu0 %1214
      %1216 = vrot.lane.b32.xlu0 %v1179, 96
      %v1217 = vpop.permute.xlu0 %1216
      %1218 = vrot.lane.b32.xlu0 %v1182, 96
      %v1219 = vpop.permute.xlu0 %1218
      %1220 = vrot.lane.b32.xlu0 %v1185, 96
      %v1221 = vpop.permute.xlu0 %1220
      %1222 = vrot.lane.b32.xlu0 %v1188, 96
      %v1223 = vpop.permute.xlu0 %1222
      %1224 = vrot.lane.b32.xlu0 %v1191, 96
      %v1225 = vpop.permute.xlu0 %1224
      %1226 = vrot.lane.b32.xlu0 %v1194, 96
      %v1227 = vpop.permute.xlu0 %1226
      %1228 = vrot.lane.b32.xlu0 %v1197, 96
      %v1229 = vpop.permute.xlu0 %1228
      %vm1230 = vcmask 261120
      %v1233 = vsel %vm1230, %v846, %v1071
      %v1236 = vsel %vm1230, %v848, %v1073
      %v1239 = vsel %vm1230, %v850, %v1075
      %v1242 = vsel %vm1230, %v852, %v1077
      %v1245 = vsel %vm1230, %v854, %v1079
      %v1248 = vsel %vm1230, %v856, %v1081
      %v1251 = vsel %vm1230, %v858, %v1083
      %v1254 = vsel %vm1230, %v860, %v1085
      %v1257 = vsel %vm1230, %v862, %v1087
      %v1260 = vsel %vm1230, %v864, %v1089
      %v1263 = vsel %vm1230, %v866, %v1091
      %v1266 = vsel %vm1230, %v868, %v1093
      %v1269 = vsel %vm1230, %v870, %v1095
      %v1272 = vsel %vm1230, %v872, %v1097
      %v1275 = vsel %vm1230, %v874, %v1099
      %v1278 = vsel %vm1230, %v876, %v1101
      %vm1279 = vcmask 523264
      %v1281 = vsel %vm1279, %v1233, %v1119
      %v1283 = vsel %vm1279, %v1236, %v1121
      %v1285 = vsel %vm1279, %v1239, %v1123
      %v1287 = vsel %vm1279, %v1242, %v1125
      %v1289 = vsel %vm1279, %v1245, %v1127
      %v1291 = vsel %vm1279, %v1248, %v1129
      %v1293 = vsel %vm1279, %v1251, %v1131
      %v1295 = vsel %vm1279, %v1254, %v1133
      %v1297 = vsel %vm1279, %v1257, %v1135
      %v1299 = vsel %vm1279, %v1260, %v1137
      %v1301 = vsel %vm1279, %v1263, %v1139
      %v1303 = vsel %vm1279, %v1266, %v1141
      %v1305 = vsel %vm1279, %v1269, %v1143
      %v1307 = vsel %vm1279, %v1272, %v1145
      %v1309 = vsel %vm1279, %v1275, %v1147
      %v1311 = vsel %vm1279, %v1278, %v1149
      %vm1312 = vcmask 785408
      %v1314 = vsel %vm1312, %v1281, %v1199
      %v1316 = vsel %vm1312, %v1283, %v1201
      %v1318 = vsel %vm1312, %v1285, %v1203
      %v1320 = vsel %vm1312, %v1287, %v1205
      %v1322 = vsel %vm1312, %v1289, %v1207
      %v1324 = vsel %vm1312, %v1291, %v1209
      %v1326 = vsel %vm1312, %v1293, %v1211
      %v1328 = vsel %vm1312, %v1295, %v1213
      %v1330 = vsel %vm1312, %v1297, %v1215
      %v1332 = vsel %vm1312, %v1299, %v1217
      %v1334 = vsel %vm1312, %v1301, %v1219
      %v1336 = vsel %vm1312, %v1303, %v1221
      %v1338 = vsel %vm1312, %v1305, %v1223
      %v1340 = vsel %vm1312, %v1307, %v1225
      %v1342 = vsel %vm1312, %v1309, %v1227
      %v1344 = vsel %vm1312, %v1311, %v1229
      %v1345 = vld [vmem:[%s2] sm:$0xf]
      %v1346 = vld [vmem:[%s2 + $0x4] sm:$0xf]
      %v1347 = vld [vmem:[%s2 + $0x8] sm:$0xf]
      %v1348 = vld [vmem:[%s2 + $0xc] sm:$0xf]
      %v1349 = vld [vmem:[%s2 + $0x10] sm:$0xf]
      %v1350 = vld [vmem:[%s2 + $0x14] sm:$0xf]
      %v1351 = vld [vmem:[%s2 + $0x18] sm:$0xf]
      %v1352 = vld [vmem:[%s2 + $0x1c] sm:$0xf]
      %v1353 = vld [vmem:[%s2 + $0x20] sm:$0xf]
      %v1354 = vld [vmem:[%s2 + $0x24] sm:$0xf]
      %v1355 = vld [vmem:[%s2 + $0x28] sm:$0xf]
      %v1356 = vld [vmem:[%s2 + $0x2c] sm:$0xf]
      %v1357 = vld [vmem:[%s2 + $0x30] sm:$0xf]
      %v1358 = vld [vmem:[%s2 + $0x34] sm:$0xf]
      %v1359 = vld [vmem:[%s2 + $0x38] sm:$0xf]
      %v1360 = vld [vmem:[%s2 + $0x3c] sm:$0xf]
      %v1361 = vld [vmem:[%s3] sm:$0x1]
      %v1363 = vperm.slane %v1361, 0
      %v1381 = vunpack.c.l.b16 %v1314
      %v1382 = vunpack.c.l.b16 %v1316
      %v1383 = vunpack.c.l.b16 %v1318
      %v1384 = vunpack.c.l.b16 %v1320
      %v1385 = vunpack.c.l.b16 %v1322
      %v1386 = vunpack.c.l.b16 %v1324
      %v1387 = vunpack.c.l.b16 %v1326
      %v1388 = vunpack.c.l.b16 %v1328
      %v1389 = vunpack.c.l.b16 %v1330
      %v1390 = vunpack.c.l.b16 %v1332
      %v1391 = vunpack.c.l.b16 %v1334
      %v1392 = vunpack.c.l.b16 %v1336
      %v1393 = vunpack.c.l.b16 %v1338
      %v1394 = vunpack.c.l.b16 %v1340
      %v1395 = vunpack.c.l.b16 %v1342
      %v1396 = vunpack.c.l.b16 %v1344
      %v1397 = vpack.c.b16 %v1382, %v1381
      %v1398 = vpack.c.b16 %v1384, %v1383
      %v1399 = vpack.c.b16 %v1386, %v1385
      %v1400 = vpack.c.b16 %v1388, %v1387
      %v1401 = vpack.c.b16 %v1390, %v1389
      %v1402 = vpack.c.b16 %v1392, %v1391
      %v1403 = vpack.c.b16 %v1394, %v1393
      %v1404 = vpack.c.b16 %v1396, %v1395
      %v1429 = vunpack.c.l.b16 %v1345
      %v1430 = vunpack.c.l.b16 %v1346
      %v1431 = vunpack.c.l.b16 %v1347
      %v1432 = vunpack.c.l.b16 %v1348
      %v1433 = vunpack.c.l.b16 %v1349
      %v1434 = vunpack.c.l.b16 %v1350
      %v1435 = vunpack.c.l.b16 %v1351
      %v1436 = vunpack.c.l.b16 %v1352
      %v1437 = vunpack.c.l.b16 %v1353
      %v1438 = vunpack.c.l.b16 %v1354
      %v1439 = vunpack.c.l.b16 %v1355
      %v1440 = vunpack.c.l.b16 %v1356
      %v1441 = vunpack.c.l.b16 %v1357
      %v1442 = vunpack.c.l.b16 %v1358
      %v1443 = vunpack.c.l.b16 %v1359
      %v1444 = vunpack.c.l.b16 %v1360
      %v1445 = vpack.c.b16 %v1430, %v1429
      %v1446 = vpack.c.b16 %v1432, %v1431
      %v1447 = vpack.c.b16 %v1434, %v1433
      %v1448 = vpack.c.b16 %v1436, %v1435
      %v1449 = vpack.c.b16 %v1438, %v1437
      %v1450 = vpack.c.b16 %v1440, %v1439
      %v1451 = vpack.c.b16 %v1442, %v1441
      %v1452 = vpack.c.b16 %v1444, %v1443
      %1461 = vmatpush.bf16.msra.mxu0 %v1452
      %1462 = vmatpush.bf16.msra.mxu0 %v1451
      %1463 = vmatpush.bf16.msra.mxu0 %v1450
      %1464 = vmatpush.bf16.msra.mxu0 %v1449
      %1465 = vmatpush.bf16.msra.mxu0 %v1448
      %1466 = vmatpush.bf16.msra.mxu0 %v1447
      %1467 = vmatpush.bf16.msra.mxu0 %v1446
      %1468 = vmatpush.bf16.msra.mxu0 %v1445
      %1469 = vmatmul.bf16.gmra.mxu0 %v1397
      %v1470 = vpop.f32.mrf.mxu0
      %v1471 = vadd.f32 %v1363, %v1470
      %v1472 = vpop.f32.mrf.mxu0
      %v1473 = vadd.f32 %v1363, %v1472
      %1474 = vmatmul.bf16.gmra.mxu0 %v1398
      %v1475 = vpop.f32.mrf.mxu0
      %v1476 = vadd.f32 %v1363, %v1475
      %v1477 = vpop.f32.mrf.mxu0
      %v1478 = vadd.f32 %v1363, %v1477
      %1479 = vmatmul.bf16.gmra.mxu0 %v1399
      %v1480 = vpop.f32.mrf.mxu0
      %v1481 = vadd.f32 %v1363, %v1480
      %v1482 = vpop.f32.mrf.mxu0
      %v1483 = vadd.f32 %v1363, %v1482
      %1484 = vmatmul.bf16.gmra.mxu0 %v1400
      %v1485 = vpop.f32.mrf.mxu0
      %v1486 = vadd.f32 %v1363, %v1485
      %v1487 = vpop.f32.mrf.mxu0
      %v1488 = vadd.f32 %v1363, %v1487
      %1489 = vmatmul.bf16.gmra.mxu0 %v1401
      %v1490 = vpop.f32.mrf.mxu0
      %v1491 = vadd.f32 %v1363, %v1490
      %v1492 = vpop.f32.mrf.mxu0
      %v1493 = vadd.f32 %v1363, %v1492
      %1494 = vmatmul.bf16.gmra.mxu0 %v1402
      %v1495 = vpop.f32.mrf.mxu0
      %v1496 = vadd.f32 %v1363, %v1495
      %v1497 = vpop.f32.mrf.mxu0
      %v1498 = vadd.f32 %v1363, %v1497
      %1499 = vmatmul.bf16.gmra.mxu0 %v1403
      %v1500 = vpop.f32.mrf.mxu0
      %v1501 = vadd.f32 %v1363, %v1500
      %v1502 = vpop.f32.mrf.mxu0
      %v1503 = vadd.f32 %v1363, %v1502
      %1504 = vmatmul.bf16.gmra.mxu0 %v1404
      %v1505 = vpop.f32.mrf.mxu0
      %v1506 = vadd.f32 %v1363, %v1505
      %v1507 = vpop.f32.mrf.mxu0
      %v1508 = vadd.f32 %v1363, %v1507
      %1509 = vdwg.mxu0
      %v1510 = vmax.f32 %v1471, 0.0
      %v1511 = vmax.f32 %v1473, 0.0
      %v1512 = vmax.f32 %v1476, 0.0
      %v1513 = vmax.f32 %v1478, 0.0
      %v1514 = vmax.f32 %v1481, 0.0
      %v1515 = vmax.f32 %v1483, 0.0
      %v1516 = vmax.f32 %v1486, 0.0
      %v1517 = vmax.f32 %v1488, 0.0
      %v1518 = vmax.f32 %v1491, 0.0
      %v1519 = vmax.f32 %v1493, 0.0
      %v1520 = vmax.f32 %v1496, 0.0
      %v1521 = vmax.f32 %v1498, 0.0
      %v1522 = vmax.f32 %v1501, 0.0
      %v1523 = vmax.f32 %v1503, 0.0
      %v1524 = vmax.f32 %v1506, 0.0
      %v1525 = vmax.f32 %v1508, 0.0
      %v1526 = vlaneseq
      %v1527 = vshrl.u32 %v1526, 7
      %vm1528 = vcmp.ge.s32.totalorder %v467, 0
      %vm1529 = vcmp.lt.s32.totalorder %v467, 16
      %vm1530 = vmand %vm1528, %vm1529
      %v1531 = vsel %vm1530, 7, 0
      %vm1532 = vcmp.ge.s32.totalorder %v467, 16
      %vm1533 = vcmp.lt.s32.totalorder %v467, 32
      %vm1534 = vmand %vm1532, %vm1533
      %v1535 = vsel %vm1534, 6, %v1531
      %vm1536 = vcmp.ge.s32.totalorder %v467, 32
      %vm1537 = vcmp.lt.s32.totalorder %v467, 48
      %vm1538 = vmand %vm1536, %vm1537
      %v1539 = vsel %vm1538, 5, %v1535
      %vm1540 = vcmp.lt.s32.totalorder %v1527, %v1539
      %v1541 = vsel %vm1540, 1, 0
      %vm1542 = vcmp.eq.s32.totalorder %v1541, 1
      %v1543 = vsel %vm1542, %v1510, 0.0
      %v1544 = vsel %vm1542, %v1511, 0.0
      %v1545 = vsel %vm1542, %v1512, 0.0
      %v1546 = vsel %vm1542, %v1513, 0.0
      %v1547 = vsel %vm1542, %v1514, 0.0
      %v1548 = vsel %vm1542, %v1515, 0.0
      %v1549 = vsel %vm1542, %v1516, 0.0
      %v1550 = vsel %vm1542, %v1517, 0.0
      %v1551 = vsel %vm1542, %v1518, 0.0
      %v1552 = vsel %vm1542, %v1519, 0.0
      %v1553 = vsel %vm1542, %v1520, 0.0
      %v1554 = vsel %vm1542, %v1521, 0.0
      %v1555 = vsel %vm1542, %v1522, 0.0
      %v1556 = vsel %vm1542, %v1523, 0.0
      %v1557 = vsel %vm1542, %v1524, 0.0
      %v1558 = vsel %vm1542, %v1525, 0.0
      %v1559 = vrot.slane %v1543, 4
      %v1560 = vmax.f32 %v1543, %v1559
      %v1561 = vrot.slane %v1560, 2
      %v1562 = vmax.f32 %v1560, %v1561
      %v1563 = vrot.slane %v1562, 1
      %v1564 = vmax.f32 %v1562, %v1563
      %v1565 = vrot.slane %v1544, 4
      %v1566 = vmax.f32 %v1544, %v1565
      %v1567 = vrot.slane %v1566, 2
      %v1568 = vmax.f32 %v1566, %v1567
      %v1569 = vrot.slane %v1568, 1
      %v1570 = vmax.f32 %v1568, %v1569
      %v1571 = vrot.slane %v1545, 4
      %v1572 = vmax.f32 %v1545, %v1571
      %v1573 = vrot.slane %v1572, 2
      %v1574 = vmax.f32 %v1572, %v1573
      %v1575 = vrot.slane %v1574, 1
      %v1576 = vmax.f32 %v1574, %v1575
      %v1577 = vrot.slane %v1546, 4
      %v1578 = vmax.f32 %v1546, %v1577
      %v1579 = vrot.slane %v1578, 2
      %v1580 = vmax.f32 %v1578, %v1579
      %v1581 = vrot.slane %v1580, 1
      %v1582 = vmax.f32 %v1580, %v1581
      %v1583 = vrot.slane %v1547, 4
      %v1584 = vmax.f32 %v1547, %v1583
      %v1585 = vrot.slane %v1584, 2
      %v1586 = vmax.f32 %v1584, %v1585
      %v1587 = vrot.slane %v1586, 1
      %v1588 = vmax.f32 %v1586, %v1587
      %v1589 = vrot.slane %v1548, 4
      %v1590 = vmax.f32 %v1548, %v1589
      %v1591 = vrot.slane %v1590, 2
      %v1592 = vmax.f32 %v1590, %v1591
      %v1593 = vrot.slane %v1592, 1
      %v1594 = vmax.f32 %v1592, %v1593
      %v1595 = vrot.slane %v1549, 4
      %v1596 = vmax.f32 %v1549, %v1595
      %v1597 = vrot.slane %v1596, 2
      %v1598 = vmax.f32 %v1596, %v1597
      %v1599 = vrot.slane %v1598, 1
      %v1600 = vmax.f32 %v1598, %v1599
      %v1601 = vrot.slane %v1550, 4
      %v1602 = vmax.f32 %v1550, %v1601
      %v1603 = vrot.slane %v1602, 2
      %v1604 = vmax.f32 %v1602, %v1603
      %v1605 = vrot.slane %v1604, 1
      %v1606 = vmax.f32 %v1604, %v1605
      %v1607 = vrot.slane %v1551, 4
      %v1608 = vmax.f32 %v1551, %v1607
      %v1609 = vrot.slane %v1608, 2
      %v1610 = vmax.f32 %v1608, %v1609
      %v1611 = vrot.slane %v1610, 1
      %v1612 = vmax.f32 %v1610, %v1611
      %v1613 = vrot.slane %v1552, 4
      %v1614 = vmax.f32 %v1552, %v1613
      %v1615 = vrot.slane %v1614, 2
      %v1616 = vmax.f32 %v1614, %v1615
      %v1617 = vrot.slane %v1616, 1
      %v1618 = vmax.f32 %v1616, %v1617
      %v1619 = vrot.slane %v1553, 4
      %v1620 = vmax.f32 %v1553, %v1619
      %v1621 = vrot.slane %v1620, 2
      %v1622 = vmax.f32 %v1620, %v1621
      %v1623 = vrot.slane %v1622, 1
      %v1624 = vmax.f32 %v1622, %v1623
      %v1625 = vrot.slane %v1554, 4
      %v1626 = vmax.f32 %v1554, %v1625
      %v1627 = vrot.slane %v1626, 2
      %v1628 = vmax.f32 %v1626, %v1627
      %v1629 = vrot.slane %v1628, 1
      %v1630 = vmax.f32 %v1628, %v1629
      %v1631 = vrot.slane %v1555, 4
      %v1632 = vmax.f32 %v1555, %v1631
      %v1633 = vrot.slane %v1632, 2
      %v1634 = vmax.f32 %v1632, %v1633
      %v1635 = vrot.slane %v1634, 1
      %v1636 = vmax.f32 %v1634, %v1635
      %v1637 = vrot.slane %v1556, 4
      %v1638 = vmax.f32 %v1556, %v1637
      %v1639 = vrot.slane %v1638, 2
      %v1640 = vmax.f32 %v1638, %v1639
      %v1641 = vrot.slane %v1640, 1
      %v1642 = vmax.f32 %v1640, %v1641
      %v1643 = vrot.slane %v1557, 4
      %v1644 = vmax.f32 %v1557, %v1643
      %v1645 = vrot.slane %v1644, 2
      %v1646 = vmax.f32 %v1644, %v1645
      %v1647 = vrot.slane %v1646, 1
      %v1648 = vmax.f32 %v1646, %v1647
      %v1649 = vrot.slane %v1558, 4
      %v1650 = vmax.f32 %v1558, %v1649
      %v1651 = vrot.slane %v1650, 2
      %v1652 = vmax.f32 %v1650, %v1651
      %v1653 = vrot.slane %v1652, 1
      %v1654 = vmax.f32 %v1652, %v1653
      %v1655 = vpack.c.bf16 %v1564, %v1564
      %v1656 = vpack.c.bf16 %v1570, %v1570
      %v1657 = vpack.c.bf16 %v1576, %v1576
      %v1658 = vpack.c.bf16 %v1582, %v1582
      %v1659 = vpack.c.bf16 %v1588, %v1588
      %v1660 = vpack.c.bf16 %v1594, %v1594
      %v1661 = vpack.c.bf16 %v1600, %v1600
      %v1662 = vpack.c.bf16 %v1606, %v1606
      %v1663 = vpack.c.bf16 %v1612, %v1612
      %v1664 = vpack.c.bf16 %v1618, %v1618
      %v1665 = vpack.c.bf16 %v1624, %v1624
      %v1666 = vpack.c.bf16 %v1630, %v1630
      %v1667 = vpack.c.bf16 %v1636, %v1636
      %v1668 = vpack.c.bf16 %v1642, %v1642
      %v1669 = vpack.c.bf16 %v1648, %v1648
      %v1670 = vpack.c.bf16 %v1654, %v1654
      %v1671 = vld [vmem:[%s4] sm:$0xf]
      %v1672 = vld [vmem:[%s4 + $0x4] sm:$0xf]
      %v1673 = vld [vmem:[%s4 + $0x8] sm:$0xf]
      %v1674 = vld [vmem:[%s4 + $0xc] sm:$0xf]
      %v1675 = vld [vmem:[%s4 + $0x10] sm:$0xf]
      %v1676 = vld [vmem:[%s4 + $0x14] sm:$0xf]
      %v1677 = vld [vmem:[%s4 + $0x18] sm:$0xf]
      %v1678 = vld [vmem:[%s4 + $0x1c] sm:$0xf]
      %v1679 = vld [vmem:[%s4 + $0x20] sm:$0xf]
      %v1680 = vld [vmem:[%s4 + $0x24] sm:$0xf]
      %v1681 = vld [vmem:[%s4 + $0x28] sm:$0xf]
      %v1682 = vld [vmem:[%s4 + $0x2c] sm:$0xf]
      %v1683 = vld [vmem:[%s4 + $0x30] sm:$0xf]
      %v1684 = vld [vmem:[%s4 + $0x34] sm:$0xf]
      %v1685 = vld [vmem:[%s4 + $0x38] sm:$0xf]
      %v1686 = vld [vmem:[%s4 + $0x3c] sm:$0xf]
      %v1687 = vld [vmem:[%s5] sm:$0x1]
      %v1689 = vperm.slane %v1687, 0
      %v1707 = vunpack.c.l.b16 %v1655
      %v1708 = vunpack.c.l.b16 %v1656
      %v1709 = vunpack.c.l.b16 %v1657
      %v1710 = vunpack.c.l.b16 %v1658
      %v1711 = vunpack.c.l.b16 %v1659
      %v1712 = vunpack.c.l.b16 %v1660
      %v1713 = vunpack.c.l.b16 %v1661
      %v1714 = vunpack.c.l.b16 %v1662
      %v1715 = vunpack.c.l.b16 %v1663
      %v1716 = vunpack.c.l.b16 %v1664
      %v1717 = vunpack.c.l.b16 %v1665
      %v1718 = vunpack.c.l.b16 %v1666
      %v1719 = vunpack.c.l.b16 %v1667
      %v1720 = vunpack.c.l.b16 %v1668
      %v1721 = vunpack.c.l.b16 %v1669
      %v1722 = vunpack.c.l.b16 %v1670
      %vm1723 = vcmask 1041409
      %v1724 = vsel %vm1723, %v1708, %v1707
      %vm1725 = vcmask 1042434
      %v1726 = vsel %vm1725, %v1709, %v1724
      %vm1727 = vcmask 1043459
      %v1728 = vsel %vm1727, %v1710, %v1726
      %vm1729 = vcmask 1044484
      %v1730 = vsel %vm1729, %v1711, %v1728
      %vm1731 = vcmask 1045509
      %v1732 = vsel %vm1731, %v1712, %v1730
      %vm1733 = vcmask 1046534
      %v1734 = vsel %vm1733, %v1713, %v1732
      %vm1735 = vcmask 1047559
      %v1736 = vsel %vm1735, %v1714, %v1734
      %v1737 = vsel %vm1723, %v1716, %v1715
      %v1738 = vsel %vm1725, %v1717, %v1737
      %v1739 = vsel %vm1727, %v1718, %v1738
      %v1740 = vsel %vm1729, %v1719, %v1739
      %v1741 = vsel %vm1731, %v1720, %v1740
      %v1742 = vsel %vm1733, %v1721, %v1741
      %v1743 = vsel %vm1735, %v1722, %v1742
      %v1744 = vpack.c.b16 %v1743, %v1736
      %v1762 = vunpack.c.l.b16 %v1671
      %v1763 = vunpack.c.l.b16 %v1672
      %v1764 = vunpack.c.l.b16 %v1673
      %v1765 = vunpack.c.l.b16 %v1674
      %v1766 = vunpack.c.l.b16 %v1675
      %v1767 = vunpack.c.l.b16 %v1676
      %v1768 = vunpack.c.l.b16 %v1677
      %v1769 = vunpack.c.l.b16 %v1678
      %v1770 = vunpack.c.l.b16 %v1679
      %v1771 = vunpack.c.l.b16 %v1680
      %v1772 = vunpack.c.l.b16 %v1681
      %v1773 = vunpack.c.l.b16 %v1682
      %v1774 = vunpack.c.l.b16 %v1683
      %v1775 = vunpack.c.l.b16 %v1684
      %v1776 = vunpack.c.l.b16 %v1685
      %v1777 = vunpack.c.l.b16 %v1686
      %v1778 = vpack.c.b16 %v1763, %v1762
      %v1779 = vpack.c.b16 %v1765, %v1764
      %v1780 = vpack.c.b16 %v1767, %v1766
      %v1781 = vpack.c.b16 %v1769, %v1768
      %v1782 = vpack.c.b16 %v1771, %v1770
      %v1783 = vpack.c.b16 %v1773, %v1772
      %v1784 = vpack.c.b16 %v1775, %v1774
      %v1785 = vpack.c.b16 %v1777, %v1776
      %1794 = vmatpush.bf16.msra.mxu0 %v1785
      %1795 = vmatpush.bf16.msra.mxu0 %v1784
      %1796 = vmatpush.bf16.msra.mxu0 %v1783
      %1797 = vmatpush.bf16.msra.mxu0 %v1782
      %1798 = vmatpush.bf16.msra.mxu0 %v1781
      %1799 = vmatpush.bf16.msra.mxu0 %v1780
      %1800 = vmatpush.bf16.msra.mxu0 %v1779
      %1801 = vmatpush.bf16.msra.mxu0 %v1778
      %1802 = vmatmul.bf16.gmra.mxu0 %v1744
      %v1803 = vpop.f32.mrf.mxu0
      %v1804 = vadd.f32 %v1689, %v1803
      %v1805 = vpop.f32.mrf.mxu0
      %v1806 = vadd.f32 %v1689, %v1805
      %1807 = vdwg.mxu0
      %1808 = vst [vmem:[%s253] sm:$0xff] %v1804
      %1809 = vst [vmem:[%s253 + $0x8] sm:$0xff] %v1806
      %s1810 = smul.u32 2, %s17
      %p1811 = scmp.lt.s32.totalorder %s1810, 7
      %s1812 = scalar_select %p1811, %s1810, 7
      %s1813 = smul.addr %s1812, 8
      %s1814 = scalar_lea.vmem %s6, %s1813
      // Predicated region
      $region45: #{textcnn_forward.1} parent=43 // pred_check
        %p1815 = pneg %p166
      $region46: #{textcnn_forward.1} parent=43 // pred_check_branch
        %1817 = sbr.rel (%p1815) target = $region48
      $region47: #{textcnn_forward.1} parent=43 // pred_region
        %s1818 = smul.u32 2, %s17
      $region48: #{textcnn_forward.1} parent=43 // pred_fallthru
        _
    $region44: #{textcnn_forward.1} parent=5 // pred_fallthru
      _
    %p1819 = scmp.le.s32.totalorder 2, %s12
    // Predicated region
    $region49: #{textcnn_forward.1} parent=5 // pred_check
      %p1820 = pneg %p1819
    $region50: #{textcnn_forward.1} parent=5 // pred_check_branch
      %1822 = sbr.rel (%p1820) target = $region52
    $region51: #{textcnn_forward.1} parent=5 // pred_region
      %s1823 = ssub.s32 %s12, 2
      // Predicated region
      $region53: #{textcnn_forward.1} parent=51 // pred_check
        %p1824 = pneg %p172
      $region54: #{textcnn_forward.1} parent=51 // pred_check_branch
        %1826 = sbr.rel (%p1824) target = $region56
      $region55: #{textcnn_forward.1} parent=51 // pred_region
        %s1827 = smul.u32 2, %s18
        %p1828 = scmp.lt.s32.totalorder %s1827, 7
        %s1829 = scalar_select %p1828, %s1827, 7
        %s1830 = smul.addr %s1829, 8
        %s1831 = scalar_lea.vmem %s6, %s1830
      $region56: #{textcnn_forward.1} parent=51 // pred_fallthru
        _
    $region52: #{textcnn_forward.1} parent=5 // pred_fallthru
      _
  $region6: #{textcnn_forward.1} parent=0 // loop_footer
    %s16 = sadd.s32 1, %s12
  $region7: #{textcnn_forward.1} parent=0 // loop_footer_branch
    %11 = sbr.rel target = $region3
  $region8: #{textcnn_forward.1} parent=0 // loop_exit
    _

</llo_original>
